<compile_context>
chip_gen: v6e
topology: v6e:2x2x1
jax: 0.10.0
libtpu: 0.0.40
codegen_flags: <defaults>
</compile_context>

<pallas_src>
import functools

import numpy as np

import jax
import jax.numpy as jnp
from jax.experimental import pallas as pl
from jax.experimental.pallas import tpu as pltpu


def _ru(x, m):
    return (x + m - 1) // m * m


# ------------------------- fused 3x3 conv + ReLU -----------------------------

def _conv3x3_kernel(xm_ref, xh_ref, w_ref, b_ref, o_ref, win_ref, acc_ref,
                    *, R, Wp):
    # xm_ref : (1, R*Wp, C)      row-flattened padded input rows [tR, tR+R)
    # xh_ref : (1, 1, 2*Wp, C)   2-row halo (padded rows tR+R, tR+R+1)
    # w_ref  : (9, C, TN)        per-tap weights, tap index = dy*3 + dx
    # b_ref  : (1, TN)           f32 bias
    # o_ref  : (1, 1, R*Wp, TN)  row-flattened output tile (2 junk cols/row)
    # win_ref: ((R+2)*Wp, C)     VMEM scratch: contiguous padded window
    # acc_ref: (R*Wp - 2, TN)    f32 accumulator
    M = R * Wp - 2

    # Assemble the contiguous (R+2)-row window in VMEM.
    win_ref[0:R * Wp, :] = xm_ref[0]
    win_ref[R * Wp:(R + 2) * Wp, :] = xh_ref[0, 0]

    # Nine shifted dots: output flat row m corresponds to (r, w) = divmod(m, Wp)
    # and tap (dy, dx) reads window row m + dy*Wp + dx.
    for dy in range(3):
        for dx in range(3):
            s = dy * Wp + dx
            a = win_ref[pl.ds(s, M), :]
            p = jnp.dot(a, w_ref[dy * 3 + dx],
                        preferred_element_type=jnp.float32)
            if dy == 0 and dx == 0:
                acc_ref[...] = p
            else:
                acc_ref[...] += p

    y = jnp.maximum(acc_ref[...] + b_ref[...], 0.0).astype(o_ref.dtype)
    o_ref[0, 0, pl.ds(0, M), :] = y
    o_ref[0, 0, pl.ds(M, 2), :] = jnp.zeros((2, y.shape[1]), o_ref.dtype)


def _conv_plan(H, C, Cout, budget=10 * 1024 * 1024):
    """Pick (row-tile R, Cout-tile tn) for a square HxH feature map."""
    Wp = H + 2
    tn = Cout if Cout <= 256 else 256
    legal = [r for r in range(1, H + 1) if H % r == 0 and (r * Wp) % 8 == 0]
    assert legal, f"no legal row tile for H={H}"

    def est(r):
        return (2 * r * Wp * C * 2          # x_main (double buffered)
                + 2 * 2 * Wp * C * 2        # halo
                + 2 * 9 * C * tn * 2        # weights
                + 2 * r * Wp * tn * 2       # output tile
                + (r + 2) * Wp * C * 2      # window scratch
                + r * Wp * tn * 4)          # f32 accumulator

    fitting = [r for r in legal if est(r) <= budget]
    R = max(fitting) if fitting else min(legal)
    return R, tn


def conv3x3_relu(x, w9, b):
    """3x3 / stride 1 / pad 1 conv + bias + ReLU.  x: (B,H,W,C) bf16 NHWC."""
    B, H, W, C = x.shape
    assert H == W, "square feature maps expected"
    Cout = w9.shape[-1]
    R, tn = _conv_plan(H, C, Cout)
    Wp = W + 2
    Ht = H // R
    nj = Cout // tn

    xp = jnp.pad(x, ((0, 0), (1, 1), (1, 1), (0, 0)))        # (B, H+2, Wp, C)
    xm = xp.reshape(B, (H + 2) * Wp, C)                       # row-flattened
    hidx = (np.arange(Ht)[:, None] * R + R + np.arange(2)).reshape(-1)
    xh = jnp.take(xp, hidx, axis=1).reshape(B, Ht, 2 * Wp, C)
    bias2 = b.astype(jnp.float32).reshape(1, Cout)

    kernel = functools.partial(_conv3x3_kernel, R=R, Wp=Wp)
    out = pl.pallas_call(
        kernel,
        out_shape=jax.ShapeDtypeStruct((B, Ht, R * Wp, Cout), jnp.bfloat16),
        grid_spec=pltpu.PrefetchScalarGridSpec(
            num_scalar_prefetch=0,
            grid=(nj, B, Ht),                # j outermost => weights DMAed once/j
            in_specs=[
                pl.BlockSpec((1, R * Wp, C), lambda j, b_, t: (b_, t, 0)),
                pl.BlockSpec((1, 1, 2 * Wp, C), lambda j, b_, t: (b_, t, 0, 0)),
                pl.BlockSpec((9, C, tn), lambda j, b_, t: (0, 0, j)),
                pl.BlockSpec((1, tn), lambda j, b_, t: (0, j)),
            ],
            out_specs=pl.BlockSpec((1, 1, R * Wp, tn),
                                   lambda j, b_, t: (b_, t, 0, j)),
            scratch_shapes=[
                pltpu.VMEM(((R + 2) * Wp, C), jnp.bfloat16),
                pltpu.VMEM((R * Wp - 2, tn), jnp.float32),
            ],
        ),
        compiler_params=pltpu.CompilerParams(
            dimension_semantics=("parallel", "parallel", "parallel"),
            vmem_limit_bytes=32 * 1024 * 1024),
        cost_estimate=pl.CostEstimate(
            flops=2 * 9 * B * H * W * C * Cout,
            transcendentals=0,
            bytes_accessed=int(xm.size * 2 + w9.size * 2
                               + B * H * W * Cout * 2)),
    )(xm, xh, w9, bias2)

    # (B, Ht, R*Wp, Cout) -> (B, H, Wp, Cout); drop the 2 junk columns per row.
    y = out.reshape(B, H, Wp, Cout)[:, :, :W, :]
    return y


# ------------------------------ max-pool 2x2/s2 ------------------------------

def _maxpool_kernel(x_ref, o_ref):
    # x_ref block: (blk, 2, Wo, 2*C) -- dim1 = row parity; last dim packs the
    # two column parities (even cols at lanes [0,C), odd at [C,2C)).
    v = x_ref[...]
    m = jnp.maximum(v[:, 0], v[:, 1])                # (blk, Wo, 2C)
    C = o_ref.shape[-1]
    o_ref[...] = jnp.maximum(m[:, :, :C], m[:, :, C:])


def maxpool2x2(x):
    """MaxPool2d(kernel_size=2, stride=2) over NHWC input (no HBM copies)."""
    B, H, W, C = x.shape
    Ho, Wo = H // 2, W // 2
    xr = x.reshape(B * Ho, 2, Wo, 2 * C)             # free reshape
    R = B * Ho

    row_bytes = 2 * Wo * 2 * C * x.dtype.itemsize
    blk = 1
    for d in range(max(R // 2, 1), 0, -1):           # keep grid >= 2 blocks
        if R % d == 0 and d * row_bytes <= (4 << 20):
            blk = d
            break

    out = pl.pallas_call(
        _maxpool_kernel,
        out_shape=jax.ShapeDtypeStruct((R, Wo, C), x.dtype),
        grid=(R // blk,),
        in_specs=[pl.BlockSpec((blk, 2, Wo, 2 * C), lambda i: (i, 0, 0, 0))],
        out_specs=pl.BlockSpec((blk, Wo, C), lambda i: (i, 0, 0)),
        compiler_params=pltpu.CompilerParams(
            dimension_semantics=("parallel",)),
    )(xr)
    return out.reshape(B, Ho, Wo, C)


# ------------------------------ GEMM (FC layers) -----------------------------

def _gemm_epilogue(y, bias, activation, alpha):
    y = y + bias
    if activation == "relu":
        y = jnp.maximum(y, 0.0)
    elif activation == "tanh":
        y = jnp.tanh(alpha * y)
    return y


def _gemm_kernel_multi_k(a_ref, b_ref, bias_ref, o_ref, acc_ref, *,
                         activation, alpha):
    @pl.when(pl.program_id(2) == 0)
    def _():
        acc_ref[...] = jnp.zeros_like(acc_ref)

    acc_ref[...] += jnp.dot(a_ref[...], b_ref[...],
                            preferred_element_type=jnp.float32)

    @pl.when(pl.program_id(2) == pl.num_programs(2) - 1)
    def _():
        o_ref[...] = _gemm_epilogue(acc_ref[...], bias_ref[...],
                                    activation, alpha).astype(o_ref.dtype)


def _gemm_kernel_single_k(a_ref, b_ref, bias_ref, o_ref, *, activation, alpha):
    y = jnp.dot(a_ref[...], b_ref[...], preferred_element_type=jnp.float32)
    o_ref[...] = _gemm_epilogue(y, bias_ref[...],
                                activation, alpha).astype(o_ref.dtype)


def _pick_tm(M, cap=512):
    if M <= cap:
        return _ru(M, 8)
    for t in range(cap, 7, -8):
        if M % t == 0:
            return t
    return 256


def _pick_tn(N):
    for t in (512, 256, 128):
        if N % t == 0:
            return t
    return N                                  # small N: one full lane block


_TK_CAND = (4096, 3584, 3072, 2816, 2560, 2304, 2048, 1792,
            1536, 1280, 1024, 896, 768, 640, 512)


def _pick_tk(K):
    if K <= 4608:                             # single K step: weights resident
        return K, K
    for t in _TK_CAND:
        if K % t == 0:
            return t, K
    return 512, _ru(K, 512)


def pallas_gemm_bias(a, b, bias, activation="none", alpha=1.0, out_dtype=None):
    """out = act(a @ b + bias).  a:(M,K) bf16, b:(K,N) bf16, bias:(N,) f32."""
    M, K = a.shape
    Kb, N = b.shape
    assert K == Kb and bias.shape == (N,)
    if out_dtype is None:
        out_dtype = a.dtype

    tm = _pick_tm(M)
    tk, Kp = _pick_tk(K)
    tn = _pick_tn(N)
    Mp = _ru(M, tm)
    Np = _ru(N, tn)

    if (Mp, Kp) != (M, K):
        a = jnp.pad(a, ((0, Mp - M), (0, Kp - K)))
    if (Kp, Np) != (K, N):
        b = jnp.pad(b, ((0, Kp - K), (0, Np - N)))
    bias2 = bias.astype(jnp.float32).reshape(1, N)
    if Np != N:
        bias2 = jnp.pad(bias2, ((0, 0), (0, Np - N)))

    cost = pl.CostEstimate(
        flops=2 * M * K * N,
        transcendentals=M * N if activation == "tanh" else 0,
        bytes_accessed=int(a.size * a.dtype.itemsize
                           + b.size * b.dtype.itemsize
                           + M * N * jnp.dtype(out_dtype).itemsize))
    single_k = (Kp == tk)
    cparams = pltpu.CompilerParams(
        dimension_semantics=(("parallel", "parallel") if single_k
                             else ("parallel", "parallel", "arbitrary")),
        vmem_limit_bytes=32 * 1024 * 1024)

    if single_k:
        out = pl.pallas_call(
            functools.partial(_gemm_kernel_single_k, activation=activation,
                              alpha=alpha),
            out_shape=jax.ShapeDtypeStruct((Mp, Np), out_dtype),
            grid_spec=pltpu.PrefetchScalarGridSpec(
                num_scalar_prefetch=0,
                grid=(Mp // tm, Np // tn),
                in_specs=[
                    pl.BlockSpec((tm, Kp), lambda i, j: (i, 0)),
                    pl.BlockSpec((Kp, tn), lambda i, j: (0, j)),
                    pl.BlockSpec((1, tn), lambda i, j: (0, j)),
                ],
                out_specs=pl.BlockSpec((tm, tn), lambda i, j: (i, j)),
            ),
            compiler_params=cparams,
            cost_estimate=cost,
        )(a, b, bias2)
    else:
        out = pl.pallas_call(
            functools.partial(_gemm_kernel_multi_k, activation=activation,
                              alpha=alpha),
            out_shape=jax.ShapeDtypeStruct((Mp, Np), out_dtype),
            grid_spec=pltpu.PrefetchScalarGridSpec(
                num_scalar_prefetch=0,
                grid=(Mp // tm, Np // tn, Kp // tk),
                in_specs=[
                    pl.BlockSpec((tm, tk), lambda i, j, k: (i, k)),
                    pl.BlockSpec((tk, tn), lambda i, j, k: (k, j)),
                    pl.BlockSpec((1, tn), lambda i, j, k: (0, j)),
                ],
                out_specs=pl.BlockSpec((tm, tn), lambda i, j, k: (i, j)),
                scratch_shapes=[pltpu.VMEM((tm, tn), jnp.float32)],
            ),
            compiler_params=cparams,
            cost_estimate=cost,
        )(a, b, bias2)

    if (Mp, Np) != (M, N):
        out = out[:M, :N]
    return out


# ------------------------------ parameters ----------------------------------

VGG_CFGS = {
    "VGG11": [64, "M", 128, "M", 256, 256, "M", 512, 512, "M", 512, 512, "M"],
    "VGG13": [64, 64, "M", 128, 128, "M", 256, 256, "M", 512, 512, "M",
              512, 512, "M"],
    "VGG16": [64, 64, "M", 128, 128, "M", 256, 256, 256, "M",
              512, 512, 512, "M", 512, 512, 512, "M"],
    "VGG19": [64, 64, "M", 128, 128, "M", 256, 256, 256, 256, "M",
              512, 512, 512, 512, "M", 512, 512, 512, 512, "M"],
}


def _prepare_conv(w, b):
    """PyTorch (Cout,Cin,3,3)/(Cout,) f32 -> (9,Cin,Cout) bf16 + (Cout,) f32."""
    cout, cin = w.shape[0], w.shape[1]
    w9 = jnp.transpose(w, (2, 3, 1, 0)).reshape(9, cin, cout)
    return w9.astype(jnp.bfloat16), b.astype(jnp.float32)


def _prepare_fc1(w, b):
    """fc1 expects NCHW flatten of (512,7,7); permute rows for NHWC flatten."""
    o, i = w.shape
    w4 = w.reshape(o, 512, 7, 7)
    w2 = jnp.transpose(w4, (2, 3, 1, 0)).reshape(i, o)   # ((h,w,c), out)
    return w2.astype(jnp.bfloat16), b.astype(jnp.float32)


def init_params(key, bit, model_name="VGG16"):
    cfg = VGG_CFGS[model_name]
    conv_channels = [v for v in cfg if v != "M"]
    ks = jax.random.split(key, len(conv_channels) + 3)

    convs = []
    cin = 3
    for idx, cout in enumerate(conv_channels):
        fan = cin * 9
        w = jax.random.normal(ks[idx], (cout, cin, 3, 3),
                              jnp.float32) * (2.0 / fan) ** 0.5
        b = jnp.zeros((cout,), jnp.float32)
        convs.append(_prepare_conv(w, b))
        cin = cout

    def lin(k, fin, fout):
        w = jax.random.normal(k, (fout, fin), jnp.float32) * (2.0 / fin) ** 0.5
        b = jnp.zeros((fout,), jnp.float32)
        return w, b

    w1, b1 = lin(ks[-3], 512 * 7 * 7, 4096)
    w2, b2 = lin(ks[-2], 4096, 4096)
    w3, b3 = lin(ks[-1], 4096, bit)
    return {
        "convs": convs,
        "fc1": _prepare_fc1(w1, b1),
        "fc2": (w2.T.astype(jnp.bfloat16), b2.astype(jnp.float32)),
        "fc3": (w3.T.astype(jnp.bfloat16), b3.astype(jnp.float32)),
    }


# ------------------------------ forward pass ---------------------------------

_IMNET_MEAN = (0.485, 0.456, 0.406)
_IMNET_STD = (0.229, 0.224, 0.225)


def vgg_forward(params, x, cfg, alpha=1.0):
    # x: (B, 3, H, W) float32, NCHW like the PyTorch module.
    mean = jnp.array(_IMNET_MEAN, jnp.float32)
    std = jnp.array(_IMNET_STD, jnp.float32)
    x = jnp.transpose(x, (0, 2, 3, 1))
    x = ((x - mean) / std).astype(jnp.bfloat16)      # exact pre-pad normalize

    conv_idx = 0
    for v in cfg:
        if v == "M":
            x = maxpool2x2(x)
        else:
            w9, b = params["convs"][conv_idx]
            x = conv3x3_relu(x, w9, b)
            conv_idx += 1

    f = x.reshape(x.shape[0], -1)          # NHWC flatten; fc1 rows pre-permuted

    # nn.Dropout layers are identity at inference time.
    w, b = params["fc1"]
    f = pallas_gemm_bias(f, w, b, activation="relu", out_dtype=jnp.bfloat16)
    w, b = params["fc2"]
    f = pallas_gemm_bias(f, w, b, activation="relu", out_dtype=jnp.bfloat16)
    w, b = params["fc3"]
    y = pallas_gemm_bias(f, w, b, activation="tanh", alpha=alpha,
                         out_dtype=jnp.float32)
    return y                                # tanh(alpha * linear(f))


# ------------------------------ demo / checks --------------------------------

if __name__ == "__main__":
    key = jax.random.PRNGKey(0)

    # --- small unit checks against pure-JAX references (bf16-matched) -------
    k1, k2, k3, k4, k5, k6, key = jax.random.split(key, 7)

    xs = jax.random.normal(k1, (2, 8, 8, 16), jnp.float32).astype(jnp.bfloat16)
    ws = (jax.random.normal(k2, (32, 16, 3, 3), jnp.float32) * 0.1)
    bs = jax.random.normal(k3, (32,), jnp.float32) * 0.1
    w9s, bfs = _prepare_conv(ws, bs)
    got = conv3x3_relu(xs, w9s, bfs).astype(jnp.float32)
    w_hwio = jnp.transpose(ws, (2, 3, 1, 0)).astype(jnp.bfloat16)
    ref = jax.lax.conv_general_dilated(
        xs.astype(jnp.float32), w_hwio.astype(jnp.float32),
        window_strides=(1, 1), padding="SAME",
        dimension_numbers=("NHWC", "HWIO", "NHWC"))
    ref = jnp.maximum(ref + bs[None, None, None, :], 0.0)
    err = float(jnp.max(jnp.abs(got - ref)))
    scale = float(jnp.max(jnp.abs(ref))) + 1e-6
    assert err <= 0.03 * scale + 0.02, f"conv kernel mismatch: {err} / {scale}"

    xp_ = jax.random.normal(k4, (2, 8, 8, 64), jnp.float32).astype(jnp.bfloat16)
    gotp = maxpool2x2(xp_).astype(jnp.float32)
    refp = jnp.max(xp_.astype(jnp.float32).reshape(2, 4, 2, 4, 2, 64),
                   axis=(2, 4))
    assert float(jnp.max(jnp.abs(gotp - refp))) <= 1e-6, "maxpool mismatch"

    aa = jax.random.normal(k5, (2, 96), jnp.float32).astype(jnp.bfloat16)
    bb = (jax.random.normal(k6, (96, 48), jnp.float32) * 0.1).astype(jnp.bfloat16)
    cc = jnp.linspace(-0.1, 0.1, 48).astype(jnp.float32)
    gotg = pallas_gemm_bias(aa, bb, cc, "relu", out_dtype=jnp.float32)
    refg = jnp.maximum(aa.astype(jnp.float32) @ bb.astype(jnp.float32) + cc, 0.0)
    errg = float(jnp.max(jnp.abs(gotg - refg)))
    sg = float(jnp.max(jnp.abs(refg))) + 1e-6
    assert errg <= 0.03 * sg + 0.02, f"gemm kernel mismatch: {errg} / {sg}"

    # --- full VGG16 forward --------------------------------------------------
    bit = 32
    model_name = "VGG16"
    kp, kx = jax.random.split(key)
    params = init_params(kp, bit, model_name)

    # VGG's classifier hard-codes 25088 = 512*7*7, which requires 224x224 input.
    x = jax.random.uniform(kx, (2, 3, 224, 224), jnp.float32)

    fwd = jax.jit(functools.partial(vgg_forward,
                                    cfg=VGG_CFGS[model_name], alpha=1.0))
    y = fwd(params, x)
    jax.block_until_ready(y)
    assert y.shape == (2, bit)
    assert bool(jnp.all(jnp.isfinite(y)))
    assert bool(jnp.all(jnp.abs(y) <= 1.0))
    print("KERNEL_OK")
</pallas_src>

<mosaic_0001>
module attributes {stable_mosaic.version = 11 : i64} {
  func.func @_conv3x3_kernel(%arg0: i32, %arg1: i32, %arg2: i32, %arg3: memref<1x80x16xbf16, #tpu.memory_space<vmem>>, %arg4: memref<1x1x20x16xbf16, #tpu.memory_space<vmem>>, %arg5: memref<9x16x32xbf16, #tpu.memory_space<vmem>>, %arg6: memref<1x32xf32, #tpu.memory_space<vmem>>, %arg7: memref<1x1x80x32xbf16, #tpu.memory_space<vmem>>, %arg8: memref<100x16xbf16, #tpu.memory_space<vmem>>, %arg9: memref<78x32xf32, #tpu.memory_space<vmem>>) attributes {dimension_semantics = [#tpu.dimension_semantics<parallel>, #tpu.dimension_semantics<parallel>, #tpu.dimension_semantics<parallel>], iteration_bounds = array<i64: 1, 2, 1>, scalar_prefetch = 0 : i64, scratch_operands = 2 : i64, tpu.core_type = #tpu.core_type<tc>, window_params = [{transform_indices = @transform_0, window_bounds = array<i64: 1, 80, 16>}, {transform_indices = @transform_1, window_bounds = array<i64: 1, 1, 20, 16>}, {transform_indices = @transform_2, window_bounds = array<i64: 9, 16, 32>}, {transform_indices = @transform_3, window_bounds = array<i64: 1, 32>}, {transform_indices = @transform_4, window_bounds = array<i64: 1, 1, 80, 32>}]} {
    %c0 = arith.constant 0 : index
    %c0_0 = arith.constant 0 : index
    %c0_1 = arith.constant 0 : index
    %0 = vector.load %arg3[%c0, %c0_0, %c0_1] : memref<1x80x16xbf16, #tpu.memory_space<vmem>>, vector<1x80x16xbf16>
    %1 = vector.shape_cast %0 : vector<1x80x16xbf16> to vector<80x16xbf16>
    %c0_2 = arith.constant 0 : index
    %c0_3 = arith.constant 0 : index
    %2 = vector.load %arg8[%c0_2, %c0_3] : memref<100x16xbf16, #tpu.memory_space<vmem>>, vector<80x16xbf16>
    tpu.vector_store %arg8[%c0_2, %c0_3], %1 {strides = array<i32>} : memref<100x16xbf16, #tpu.memory_space<vmem>>, vector<80x16xbf16>,
    %c0_4 = arith.constant 0 : index
    %c0_5 = arith.constant 0 : index
    %c0_6 = arith.constant 0 : index
    %c0_7 = arith.constant 0 : index
    %3 = vector.load %arg4[%c0_4, %c0_5, %c0_6, %c0_7] : memref<1x1x20x16xbf16, #tpu.memory_space<vmem>>, vector<1x1x20x16xbf16>
    %4 = vector.shape_cast %3 : vector<1x1x20x16xbf16> to vector<20x16xbf16>
    %c80 = arith.constant 80 : index
    %c0_8 = arith.constant 0 : index
    %5 = vector.load %arg8[%c80, %c0_8] : memref<100x16xbf16, #tpu.memory_space<vmem>>, vector<20x16xbf16>
    tpu.vector_store %arg8[%c80, %c0_8], %4 {strides = array<i32>} : memref<100x16xbf16, #tpu.memory_space<vmem>>, vector<20x16xbf16>,
    %c0_9 = arith.constant 0 : index
    %c0_10 = arith.constant 0 : index
    %6 = vector.load %arg8[%c0_9, %c0_10] : memref<100x16xbf16, #tpu.memory_space<vmem>>, vector<78x16xbf16>
    %c0_11 = arith.constant 0 : index
    %c0_12 = arith.constant 0 : index
    %c0_13 = arith.constant 0 : index
    %7 = vector.load %arg5[%c0_11, %c0_12, %c0_13] : memref<9x16x32xbf16, #tpu.memory_space<vmem>>, vector<1x16x32xbf16>
    %8 = vector.shape_cast %7 : vector<1x16x32xbf16> to vector<16x32xbf16>
    %cst = arith.constant dense<0.000000e+00> : vector<78x32xf32>
    %9 = tpu.matmul %6, %8, %cst {dimension_numbers = #tpu.dot_dimension_numbers<[1], [0], [0], [1], [0, 0, 1, 1], [], []>} : vector<78x16xbf16>, vector<16x32xbf16>, vector<78x32xf32> -> vector<78x32xf32>
    %c0_14 = arith.constant 0 : index
    %c0_15 = arith.constant 0 : index
    %10 = vector.load %arg9[%c0_14, %c0_15] : memref<78x32xf32, #tpu.memory_space<vmem>>, vector<78x32xf32>
    tpu.vector_store %arg9[%c0_14, %c0_15], %9 {strides = array<i32>} : memref<78x32xf32, #tpu.memory_space<vmem>>, vector<78x32xf32>,
    %c1 = arith.constant 1 : index
    %c0_16 = arith.constant 0 : index
    %11 = vector.load %arg8[%c1, %c0_16] : memref<100x16xbf16, #tpu.memory_space<vmem>>, vector<78x16xbf16>
    %c1_17 = arith.constant 1 : index
    %c0_18 = arith.constant 0 : index
    %c0_19 = arith.constant 0 : index
    %12 = vector.load %arg5[%c1_17, %c0_18, %c0_19] : memref<9x16x32xbf16, #tpu.memory_space<vmem>>, vector<1x16x32xbf16>
    %13 = vector.shape_cast %12 : vector<1x16x32xbf16> to vector<16x32xbf16>
    %cst_20 = arith.constant dense<0.000000e+00> : vector<78x32xf32>
    %14 = tpu.matmul %11, %13, %cst_20 {dimension_numbers = #tpu.dot_dimension_numbers<[1], [0], [0], [1], [0, 0, 1, 1], [], []>} : vector<78x16xbf16>, vector<16x32xbf16>, vector<78x32xf32> -> vector<78x32xf32>
    %c0_21 = arith.constant 0 : index
    %c0_22 = arith.constant 0 : index
    %15 = vector.load %arg9[%c0_21, %c0_22] : memref<78x32xf32, #tpu.memory_space<vmem>>, vector<78x32xf32>
    %16 = arith.addf %15, %14 : vector<78x32xf32>
    %c0_23 = arith.constant 0 : index
    %c0_24 = arith.constant 0 : index
    %17 = vector.load %arg9[%c0_23, %c0_24] : memref<78x32xf32, #tpu.memory_space<vmem>>, vector<78x32xf32>
    tpu.vector_store %arg9[%c0_23, %c0_24], %16 {strides = array<i32>} : memref<78x32xf32, #tpu.memory_space<vmem>>, vector<78x32xf32>,
    %c2 = arith.constant 2 : index
    %c0_25 = arith.constant 0 : index
    %18 = vector.load %arg8[%c2, %c0_25] : memref<100x16xbf16, #tpu.memory_space<vmem>>, vector<78x16xbf16>
    %c2_26 = arith.constant 2 : index
    %c0_27 = arith.constant 0 : index
    %c0_28 = arith.constant 0 : index
    %19 = vector.load %arg5[%c2_26, %c0_27, %c0_28] : memref<9x16x32xbf16, #tpu.memory_space<vmem>>, vector<1x16x32xbf16>
    %20 = vector.shape_cast %19 : vector<1x16x32xbf16> to vector<16x32xbf16>
    %cst_29 = arith.constant dense<0.000000e+00> : vector<78x32xf32>
    %21 = tpu.matmul %18, %20, %cst_29 {dimension_numbers = #tpu.dot_dimension_numbers<[1], [0], [0], [1], [0, 0, 1, 1], [], []>} : vector<78x16xbf16>, vector<16x32xbf16>, vector<78x32xf32> -> vector<78x32xf32>
    %c0_30 = arith.constant 0 : index
    %c0_31 = arith.constant 0 : index
    %22 = vector.load %arg9[%c0_30, %c0_31] : memref<78x32xf32, #tpu.memory_space<vmem>>, vector<78x32xf32>
    %23 = arith.addf %22, %21 : vector<78x32xf32>
    %c0_32 = arith.constant 0 : index
    %c0_33 = arith.constant 0 : index
    %24 = vector.load %arg9[%c0_32, %c0_33] : memref<78x32xf32, #tpu.memory_space<vmem>>, vector<78x32xf32>
    tpu.vector_store %arg9[%c0_32, %c0_33], %23 {strides = array<i32>} : memref<78x32xf32, #tpu.memory_space<vmem>>, vector<78x32xf32>,
    %c10 = arith.constant 10 : index
    %c0_34 = arith.constant 0 : index
    %25 = vector.load %arg8[%c10, %c0_34] : memref<100x16xbf16, #tpu.memory_space<vmem>>, vector<78x16xbf16>
    %c3 = arith.constant 3 : index
    %c0_35 = arith.constant 0 : index
    %c0_36 = arith.constant 0 : index
    %26 = vector.load %arg5[%c3, %c0_35, %c0_36] : memref<9x16x32xbf16, #tpu.memory_space<vmem>>, vector<1x16x32xbf16>
    %27 = vector.shape_cast %26 : vector<1x16x32xbf16> to vector<16x32xbf16>
    %cst_37 = arith.constant dense<0.000000e+00> : vector<78x32xf32>
    %28 = tpu.matmul %25, %27, %cst_37 {dimension_numbers = #tpu.dot_dimension_numbers<[1], [0], [0], [1], [0, 0, 1, 1], [], []>} : vector<78x16xbf16>, vector<16x32xbf16>, vector<78x32xf32> -> vector<78x32xf32>
    %c0_38 = arith.constant 0 : index
    %c0_39 = arith.constant 0 : index
    %29 = vector.load %arg9[%c0_38, %c0_39] : memref<78x32xf32, #tpu.memory_space<vmem>>, vector<78x32xf32>
    %30 = arith.addf %29, %28 : vector<78x32xf32>
    %c0_40 = arith.constant 0 : index
    %c0_41 = arith.constant 0 : index
    %31 = vector.load %arg9[%c0_40, %c0_41] : memref<78x32xf32, #tpu.memory_space<vmem>>, vector<78x32xf32>
    tpu.vector_store %arg9[%c0_40, %c0_41], %30 {strides = array<i32>} : memref<78x32xf32, #tpu.memory_space<vmem>>, vector<78x32xf32>,
    %c11 = arith.constant 11 : index
    %c0_42 = arith.constant 0 : index
    %32 = vector.load %arg8[%c11, %c0_42] : memref<100x16xbf16, #tpu.memory_space<vmem>>, vector<78x16xbf16>
    %c4 = arith.constant 4 : index
    %c0_43 = arith.constant 0 : index
    %c0_44 = arith.constant 0 : index
    %33 = vector.load %arg5[%c4, %c0_43, %c0_44] : memref<9x16x32xbf16, #tpu.memory_space<vmem>>, vector<1x16x32xbf16>
    %34 = vector.shape_cast %33 : vector<1x16x32xbf16> to vector<16x32xbf16>
    %cst_45 = arith.constant dense<0.000000e+00> : vector<78x32xf32>
    %35 = tpu.matmul %32, %34, %cst_45 {dimension_numbers = #tpu.dot_dimension_numbers<[1], [0], [0], [1], [0, 0, 1, 1], [], []>} : vector<78x16xbf16>, vector<16x32xbf16>, vector<78x32xf32> -> vector<78x32xf32>
    %c0_46 = arith.constant 0 : index
    %c0_47 = arith.constant 0 : index
    %36 = vector.load %arg9[%c0_46, %c0_47] : memref<78x32xf32, #tpu.memory_space<vmem>>, vector<78x32xf32>
    %37 = arith.addf %36, %35 : vector<78x32xf32>
    %c0_48 = arith.constant 0 : index
    %c0_49 = arith.constant 0 : index
    %38 = vector.load %arg9[%c0_48, %c0_49] : memref<78x32xf32, #tpu.memory_space<vmem>>, vector<78x32xf32>
    tpu.vector_store %arg9[%c0_48, %c0_49], %37 {strides = array<i32>} : memref<78x32xf32, #tpu.memory_space<vmem>>, vector<78x32xf32>,
    %c12 = arith.constant 12 : index
    %c0_50 = arith.constant 0 : index
    %39 = vector.load %arg8[%c12, %c0_50] : memref<100x16xbf16, #tpu.memory_space<vmem>>, vector<78x16xbf16>
    %c5 = arith.constant 5 : index
    %c0_51 = arith.constant 0 : index
    %c0_52 = arith.constant 0 : index
    %40 = vector.load %arg5[%c5, %c0_51, %c0_52] : memref<9x16x32xbf16, #tpu.memory_space<vmem>>, vector<1x16x32xbf16>
    %41 = vector.shape_cast %40 : vector<1x16x32xbf16> to vector<16x32xbf16>
    %cst_53 = arith.constant dense<0.000000e+00> : vector<78x32xf32>
    %42 = tpu.matmul %39, %41, %cst_53 {dimension_numbers = #tpu.dot_dimension_numbers<[1], [0], [0], [1], [0, 0, 1, 1], [], []>} : vector<78x16xbf16>, vector<16x32xbf16>, vector<78x32xf32> -> vector<78x32xf32>
    %c0_54 = arith.constant 0 : index
    %c0_55 = arith.constant 0 : index
    %43 = vector.load %arg9[%c0_54, %c0_55] : memref<78x32xf32, #tpu.memory_space<vmem>>, vector<78x32xf32>
    %44 = arith.addf %43, %42 : vector<78x32xf32>
    %c0_56 = arith.constant 0 : index
    %c0_57 = arith.constant 0 : index
    %45 = vector.load %arg9[%c0_56, %c0_57] : memref<78x32xf32, #tpu.memory_space<vmem>>, vector<78x32xf32>
    tpu.vector_store %arg9[%c0_56, %c0_57], %44 {strides = array<i32>} : memref<78x32xf32, #tpu.memory_space<vmem>>, vector<78x32xf32>,
    %c20 = arith.constant 20 : index
    %c0_58 = arith.constant 0 : index
    %46 = vector.load %arg8[%c20, %c0_58] : memref<100x16xbf16, #tpu.memory_space<vmem>>, vector<78x16xbf16>
    %c6 = arith.constant 6 : index
    %c0_59 = arith.constant 0 : index
    %c0_60 = arith.constant 0 : index
    %47 = vector.load %arg5[%c6, %c0_59, %c0_60] : memref<9x16x32xbf16, #tpu.memory_space<vmem>>, vector<1x16x32xbf16>
    %48 = vector.shape_cast %47 : vector<1x16x32xbf16> to vector<16x32xbf16>
    %cst_61 = arith.constant dense<0.000000e+00> : vector<78x32xf32>
    %49 = tpu.matmul %46, %48, %cst_61 {dimension_numbers = #tpu.dot_dimension_numbers<[1], [0], [0], [1], [0, 0, 1, 1], [], []>} : vector<78x16xbf16>, vector<16x32xbf16>, vector<78x32xf32> -> vector<78x32xf32>
    %c0_62 = arith.constant 0 : index
    %c0_63 = arith.constant 0 : index
    %50 = vector.load %arg9[%c0_62, %c0_63] : memref<78x32xf32, #tpu.memory_space<vmem>>, vector<78x32xf32>
    %51 = arith.addf %50, %49 : vector<78x32xf32>
    %c0_64 = arith.constant 0 : index
    %c0_65 = arith.constant 0 : index
    %52 = vector.load %arg9[%c0_64, %c0_65] : memref<78x32xf32, #tpu.memory_space<vmem>>, vector<78x32xf32>
    tpu.vector_store %arg9[%c0_64, %c0_65], %51 {strides = array<i32>} : memref<78x32xf32, #tpu.memory_space<vmem>>, vector<78x32xf32>,
    %c21 = arith.constant 21 : index
    %c0_66 = arith.constant 0 : index
    %53 = vector.load %arg8[%c21, %c0_66] : memref<100x16xbf16, #tpu.memory_space<vmem>>, vector<78x16xbf16>
    %c7 = arith.constant 7 : index
    %c0_67 = arith.constant 0 : index
    %c0_68 = arith.constant 0 : index
    %54 = vector.load %arg5[%c7, %c0_67, %c0_68] : memref<9x16x32xbf16, #tpu.memory_space<vmem>>, vector<1x16x32xbf16>
    %55 = vector.shape_cast %54 : vector<1x16x32xbf16> to vector<16x32xbf16>
    %cst_69 = arith.constant dense<0.000000e+00> : vector<78x32xf32>
    %56 = tpu.matmul %53, %55, %cst_69 {dimension_numbers = #tpu.dot_dimension_numbers<[1], [0], [0], [1], [0, 0, 1, 1], [], []>} : vector<78x16xbf16>, vector<16x32xbf16>, vector<78x32xf32> -> vector<78x32xf32>
    %c0_70 = arith.constant 0 : index
    %c0_71 = arith.constant 0 : index
    %57 = vector.load %arg9[%c0_70, %c0_71] : memref<78x32xf32, #tpu.memory_space<vmem>>, vector<78x32xf32>
    %58 = arith.addf %57, %56 : vector<78x32xf32>
    %c0_72 = arith.constant 0 : index
    %c0_73 = arith.constant 0 : index
    %59 = vector.load %arg9[%c0_72, %c0_73] : memref<78x32xf32, #tpu.memory_space<vmem>>, vector<78x32xf32>
    tpu.vector_store %arg9[%c0_72, %c0_73], %58 {strides = array<i32>} : memref<78x32xf32, #tpu.memory_space<vmem>>, vector<78x32xf32>,
    %c22 = arith.constant 22 : index
    %c0_74 = arith.constant 0 : index
    %60 = vector.load %arg8[%c22, %c0_74] : memref<100x16xbf16, #tpu.memory_space<vmem>>, vector<78x16xbf16>
    %c8 = arith.constant 8 : index
    %c0_75 = arith.constant 0 : index
    %c0_76 = arith.constant 0 : index
    %61 = vector.load %arg5[%c8, %c0_75, %c0_76] : memref<9x16x32xbf16, #tpu.memory_space<vmem>>, vector<1x16x32xbf16>
    %62 = vector.shape_cast %61 : vector<1x16x32xbf16> to vector<16x32xbf16>
    %cst_77 = arith.constant dense<0.000000e+00> : vector<78x32xf32>
    %63 = tpu.matmul %60, %62, %cst_77 {dimension_numbers = #tpu.dot_dimension_numbers<[1], [0], [0], [1], [0, 0, 1, 1], [], []>} : vector<78x16xbf16>, vector<16x32xbf16>, vector<78x32xf32> -> vector<78x32xf32>
    %c0_78 = arith.constant 0 : index
    %c0_79 = arith.constant 0 : index
    %64 = vector.load %arg9[%c0_78, %c0_79] : memref<78x32xf32, #tpu.memory_space<vmem>>, vector<78x32xf32>
    %65 = arith.addf %64, %63 : vector<78x32xf32>
    %c0_80 = arith.constant 0 : index
    %c0_81 = arith.constant 0 : index
    %66 = vector.load %arg9[%c0_80, %c0_81] : memref<78x32xf32, #tpu.memory_space<vmem>>, vector<78x32xf32>
    tpu.vector_store %arg9[%c0_80, %c0_81], %65 {strides = array<i32>} : memref<78x32xf32, #tpu.memory_space<vmem>>, vector<78x32xf32>,
    %c0_82 = arith.constant 0 : index
    %c0_83 = arith.constant 0 : index
    %67 = vector.load %arg9[%c0_82, %c0_83] : memref<78x32xf32, #tpu.memory_space<vmem>>, vector<78x32xf32>
    %c0_84 = arith.constant 0 : index
    %c0_85 = arith.constant 0 : index
    %68 = vector.load %arg6[%c0_84, %c0_85] : memref<1x32xf32, #tpu.memory_space<vmem>>, vector<1x32xf32>
    %69 = vector.broadcast %68 : vector<1x32xf32> to vector<78x32xf32>
    %70 = arith.addf %67, %69 : vector<78x32xf32>
    %cst_86 = arith.constant 0.000000e+00 : f32
    %71 = vector.broadcast %cst_86 : f32 to vector<78x32xf32>
    %72 = arith.maximumf %70, %71 : vector<78x32xf32>
    %73 = arith.truncf %72 : vector<78x32xf32> to vector<78x32xbf16>
    %c0_87 = arith.constant 0 : index
    %c0_88 = arith.constant 0 : index
    %c0_89 = arith.constant 0 : index
    %c0_90 = arith.constant 0 : index
    %74 = vector.load %arg7[%c0_87, %c0_88, %c0_89, %c0_90] : memref<1x1x80x32xbf16, #tpu.memory_space<vmem>>, vector<1x1x78x32xbf16>
    %75 = vector.shape_cast %74 : vector<1x1x78x32xbf16> to vector<78x32xbf16>
    %76 = vector.shape_cast %73 : vector<78x32xbf16> to vector<1x1x78x32xbf16>
    tpu.vector_store %arg7[%c0_87, %c0_88, %c0_89, %c0_90], %76 {strides = array<i32>} : memref<1x1x80x32xbf16, #tpu.memory_space<vmem>>, vector<1x1x78x32xbf16>,
    %cst_91 = arith.constant 0.000000e+00 : bf16
    %77 = vector.broadcast %cst_91 : bf16 to vector<2x32xbf16>
    %c0_92 = arith.constant 0 : index
    %c0_93 = arith.constant 0 : index
    %c78 = arith.constant 78 : index
    %c0_94 = arith.constant 0 : index
    %78 = vector.load %arg7[%c0_92, %c0_93, %c78, %c0_94] : memref<1x1x80x32xbf16, #tpu.memory_space<vmem>>, vector<1x1x2x32xbf16>
    %79 = vector.shape_cast %78 : vector<1x1x2x32xbf16> to vector<2x32xbf16>
    %80 = vector.shape_cast %77 : vector<2x32xbf16> to vector<1x1x2x32xbf16>
    tpu.vector_store %arg7[%c0_92, %c0_93, %c78, %c0_94], %80 {strides = array<i32>} : memref<1x1x80x32xbf16, #tpu.memory_space<vmem>>, vector<1x1x2x32xbf16>,
    return
  }
  func.func @transform_0(%arg0: i32, %arg1: i32, %arg2: i32) -> (i32, i32, i32) {
    %c0_i32 = arith.constant 0 : i32
    %c0_i32_0 = arith.constant 0 : i32
    return %arg1, %arg2, %c0_i32 : i32, i32, i32
  }
  func.func @transform_1(%arg0: i32, %arg1: i32, %arg2: i32) -> (i32, i32, i32, i32) {
    %c0_i32 = arith.constant 0 : i32
    %c0_i32_0 = arith.constant 0 : i32
    %c0_i32_1 = arith.constant 0 : i32
    return %arg1, %arg2, %c0_i32, %c0_i32_0 : i32, i32, i32, i32
  }
  func.func @transform_2(%arg0: i32, %arg1: i32, %arg2: i32) -> (i32, i32, i32) {
    %c0_i32 = arith.constant 0 : i32
    %c0_i32_0 = arith.constant 0 : i32
    %c0_i32_1 = arith.constant 0 : i32
    return %c0_i32, %c0_i32_0, %arg0 : i32, i32, i32
  }
  func.func @transform_3(%arg0: i32, %arg1: i32, %arg2: i32) -> (i32, i32) {
    %c0_i32 = arith.constant 0 : i32
    %c0_i32_0 = arith.constant 0 : i32
    return %c0_i32, %arg0 : i32, i32
  }
  func.func @transform_4(%arg0: i32, %arg1: i32, %arg2: i32) -> (i32, i32, i32, i32) {
    %c0_i32 = arith.constant 0 : i32
    %c0_i32_0 = arith.constant 0 : i32
    return %arg1, %arg2, %c0_i32, %arg0 : i32, i32, i32, i32
  }
}

</mosaic_0001>

<llo_original>
// kernel: tpu_custom_call.1
$region0: #{tpu_custom_call.1}
  #allocation0 [shape = 'u32[]', space=smem, size = 0x4, offset = 0x4, fixed_abs, tag = 'smem constant byte address 0x4 - core index']
  #allocation1 [shape = 'u32[144,128]{1,0:T(1,128)}', space=vmem, size = 0x12000, scoped, tag = 'internal scratch']
  #allocation2 [shape = 'bf16[100,16]{1,0:T(8,128)(2,1)}', space=vmem, size = 0x6800, scoped, tag = 'scratch operand']
  #allocation3 [shape = 'f32[78,32]{1,0:T(8,128)}', space=vmem, size = 0xa000, scoped, tag = 'scratch operand']
  %s0 = inlined_call_operand.vmem [shape: bf16[2,100,16], index: 0, kind: input, shape index: {}]
  %s1 = inlined_call_operand.vmem [shape: bf16[2,1,20,16], index: 1, kind: input, shape index: {}]
  %s2 = inlined_call_operand.vmem [shape: bf16[9,16,32], index: 2, kind: input, shape index: {}]
  %s3 = inlined_call_operand.vmem [shape: f32[1,32], index: 3, kind: input, shape index: {}]
  %s4 = inlined_call_operand.vmem [shape: bf16[2,1,80,32], index: 4, kind: output, shape index: {}]
  %s5 = sld [smem:[#allocation0]]
  $region49: #{tpu_custom_call.1} parent=0
    _
  %s7 = ssub.s32 1, %s5
  %s8 = scalar_select 0, %s7, %s5
  loop: start=0, step=1, limit=4
  $region2: #{tpu_custom_call.1} parent=0 // loop_pre_header
    _
  $region3: #{tpu_custom_call.1} parent=0 // loop_header
    %s10 = sphi 0, %s14
    %p11 = scmp.ge.s32.totalorder %s10, 4
    %s17 = sphi 0, %s36
    %s18 = sphi 0, %s32
    %s19 = sphi 0, %s28
    %s20 = sphi 0, %s17
    %s21 = sphi 0, %s18
    %s22 = sphi 0, %s19
    %s23 = sphi 0, %s20
    %s24 = sphi 0, %s21
    %s25 = sphi 0, %s22
    %s41 = sphi 0, %s43
    %s44 = sphi 0, %s41
    %s45 = sphi 0, %s44
    %s61 = sphi 0, %s45
    %s69 = sphi 0, %s71
    %s72 = sphi 0, %s69
    %s73 = sphi 0, %s72
    %s89 = sphi 0, %s73
    %s95 = sphi 0, %s97
    %s98 = sphi 0, %s95
    %s99 = sphi 0, %s98
    %s115 = sphi 0, %s99
    %s121 = sphi 0, %s123
    %s124 = sphi 0, %s121
    %s125 = sphi 0, %s124
    %s141 = sphi 0, %s125
    %s151 = sphi 0, %s153
    %s154 = sphi 0, %s151
    %s155 = sphi 0, %s154
    %s171 = sphi 0, %s155
  $region4: #{tpu_custom_call.1} parent=0 // loop_header_branch
    %13 = sbr.rel (%p11) target = $region8
  $region5: #{tpu_custom_call.1} parent=0 // loop_body
    %s15 = ssub.s32 %s10, 1
    %s16 = ssub.s32 %s10, 2
    %s26 = sadd.s32 1, %s19
    %p27 = scmp.ge.s32.totalorder %s26, 1
    %s28 = scalar_select %p27, 0, %s26
    %s29 = sadd.s32 1, %s18
    %s30 = scalar_select %p27, %s29, %s18
    %p31 = scmp.ge.s32.totalorder %s30, 2
    %s32 = scalar_select %p31, 0, %s30
    %s33 = sadd.s32 1, %s17
    %s34 = scalar_select %p31, %s33, %s17
    %p35 = scmp.ge.s32.totalorder %s34, 1
    %s36 = scalar_select %p35, 0, %s34
    %s37 = ssub.s32 %s18, %s32
    %s38 = ssub.s32 %s19, %s28
    %s39 = sor.u32 %s37, %s38
    %p40 = scmp.eq.s32.totalorder %s39, 0
    %s42 = sadd.s32 %s41, 1
    %s43 = scalar_select %p40, %s41, %s42
    %p46 = pneg %p40
    %p47 = scmp.eq.s32.totalorder %s10, 1
    %p48 = por %p46, %p47
    %p49 = scmp.ne.s32.totalorder %s41, %s44
    %p50 = scmp.eq.s32.totalorder %s10, 0
    %p51 = por %p49, %p50
    %p52 = scmp.ne.s32.totalorder %s41, %s44
    %p53 = scmp.eq.s32.totalorder %s15, 1
    %p54 = por %p52, %p53
    %p55 = scmp.ne.s32.totalorder %s44, %s45
    %p56 = scmp.eq.s32.totalorder %s15, 0
    %p57 = por %p55, %p56
    %p58 = scmp.ne.s32.totalorder %s44, %s45
    %p59 = scmp.eq.s32.totalorder %s16, 1
    %p60 = por %p58, %p59
    %p62 = scmp.ne.s32.totalorder %s45, %s61
    %p63 = scmp.eq.s32.totalorder %s16, 0
    %p64 = por %p62, %p63
    %s65 = ssub.s32 %s18, %s32
    %s66 = ssub.s32 %s19, %s28
    %s67 = sor.u32 %s65, %s66
    %p68 = scmp.eq.s32.totalorder %s67, 0
    %s70 = sadd.s32 %s69, 1
    %s71 = scalar_select %p68, %s69, %s70
    %p74 = pneg %p68
    %p75 = scmp.eq.s32.totalorder %s10, 1
    %p76 = por %p74, %p75
    %p77 = scmp.ne.s32.totalorder %s69, %s72
    %p78 = scmp.eq.s32.totalorder %s10, 0
    %p79 = por %p77, %p78
    %p80 = scmp.ne.s32.totalorder %s69, %s72
    %p81 = scmp.eq.s32.totalorder %s15, 1
    %p82 = por %p80, %p81
    %p83 = scmp.ne.s32.totalorder %s72, %s73
    %p84 = scmp.eq.s32.totalorder %s15, 0
    %p85 = por %p83, %p84
    %p86 = scmp.ne.s32.totalorder %s72, %s73
    %p87 = scmp.eq.s32.totalorder %s16, 1
    %p88 = por %p86, %p87
    %p90 = scmp.ne.s32.totalorder %s73, %s89
    %p91 = scmp.eq.s32.totalorder %s16, 0
    %p92 = por %p90, %p91
    %s93 = ssub.s32 %s17, %s36
    %p94 = scmp.eq.s32.totalorder %s93, 0
    %s96 = sadd.s32 %s95, 1
    %s97 = scalar_select %p94, %s95, %s96
    %p100 = pneg %p94
    %p101 = scmp.eq.s32.totalorder %s10, 1
    %p102 = por %p100, %p101
    %p103 = scmp.ne.s32.totalorder %s95, %s98
    %p104 = scmp.eq.s32.totalorder %s10, 0
    %p105 = por %p103, %p104
    %p106 = scmp.ne.s32.totalorder %s95, %s98
    %p107 = scmp.eq.s32.totalorder %s15, 1
    %p108 = por %p106, %p107
    %p109 = scmp.ne.s32.totalorder %s98, %s99
    %p110 = scmp.eq.s32.totalorder %s15, 0
    %p111 = por %p109, %p110
    %p112 = scmp.ne.s32.totalorder %s98, %s99
    %p113 = scmp.eq.s32.totalorder %s16, 1
    %p114 = por %p112, %p113
    %p116 = scmp.ne.s32.totalorder %s99, %s115
    %p117 = scmp.eq.s32.totalorder %s16, 0
    %p118 = por %p116, %p117
    %s119 = ssub.s32 %s17, %s36
    %p120 = scmp.eq.s32.totalorder %s119, 0
    %s122 = sadd.s32 %s121, 1
    %s123 = scalar_select %p120, %s121, %s122
    %p126 = pneg %p120
    %p127 = scmp.eq.s32.totalorder %s10, 1
    %p128 = por %p126, %p127
    %p129 = scmp.ne.s32.totalorder %s121, %s124
    %p130 = scmp.eq.s32.totalorder %s10, 0
    %p131 = por %p129, %p130
    %p132 = scmp.ne.s32.totalorder %s121, %s124
    %p133 = scmp.eq.s32.totalorder %s15, 1
    %p134 = por %p132, %p133
    %p135 = scmp.ne.s32.totalorder %s124, %s125
    %p136 = scmp.eq.s32.totalorder %s15, 0
    %p137 = por %p135, %p136
    %p138 = scmp.ne.s32.totalorder %s124, %s125
    %p139 = scmp.eq.s32.totalorder %s16, 1
    %p140 = por %p138, %p139
    %p142 = scmp.ne.s32.totalorder %s125, %s141
    %p143 = scmp.eq.s32.totalorder %s16, 0
    %p144 = por %p142, %p143
    %s145 = ssub.s32 %s18, %s32
    %s146 = ssub.s32 %s19, %s28
    %s147 = sor.u32 %s145, %s146
    %s148 = ssub.s32 %s17, %s36
    %s149 = sor.u32 %s147, %s148
    %p150 = scmp.eq.s32.totalorder %s149, 0
    %s152 = sadd.s32 %s151, 1
    %s153 = scalar_select %p150, %s151, %s152
    %p156 = pneg %p150
    %p157 = scmp.eq.s32.totalorder %s10, 1
    %p158 = por %p156, %p157
    %p159 = scmp.ne.s32.totalorder %s151, %s154
    %p160 = scmp.eq.s32.totalorder %s10, 0
    %p161 = por %p159, %p160
    %p162 = scmp.ne.s32.totalorder %s151, %s154
    %p163 = scmp.eq.s32.totalorder %s15, 1
    %p164 = por %p162, %p163
    %p165 = scmp.ne.s32.totalorder %s154, %s155
    %p166 = scmp.eq.s32.totalorder %s15, 0
    %p167 = por %p165, %p166
    %p168 = scmp.ne.s32.totalorder %s154, %s155
    %p169 = scmp.eq.s32.totalorder %s16, 1
    %p170 = por %p168, %p169
    %p172 = scmp.ne.s32.totalorder %s155, %s171
    %p173 = scmp.eq.s32.totalorder %s16, 0
    %p174 = por %p172, %p173
    %p175 = scmp.le.s32.totalorder 1, %s10
    %p176 = scmp.lt.s32.totalorder %s10, 3
    %p177 = pnand %p175, %p176
    %p178 = pneg %p177
    // Predicated region
    $region9: #{tpu_custom_call.1} parent=5 // pred_check
      _
    $region10: #{tpu_custom_call.1} parent=5 // pred_check_branch
      %180 = sbr.rel (%p177) target = $region12
    $region11: #{tpu_custom_call.1} parent=5 // pred_region
      %s181 = ssub.s32 %s10, 1
      // Predicated region
      $region13: #{tpu_custom_call.1} parent=11 // pred_check
        %p182 = pneg %p111
      $region14: #{tpu_custom_call.1} parent=11 // pred_check_branch
        %184 = sbr.rel (%p182) target = $region16
      $region15: #{tpu_custom_call.1} parent=11 // pred_region
        %p185 = scmp.lt.s32.totalorder %s20, 0
        %s186 = scalar_select %p185, %s20, 0
        %s187 = smul.addr %s186, 4
        %s188 = scalar_lea.vmem %s2, %s187
      $region16: #{tpu_custom_call.1} parent=11 // pred_fallthru
        _
      // Predicated region
      $region17: #{tpu_custom_call.1} parent=11 // pred_check
        %p189 = pneg %p137
      $region18: #{tpu_custom_call.1} parent=11 // pred_check_branch
        %191 = sbr.rel (%p189) target = $region20
      $region19: #{tpu_custom_call.1} parent=11 // pred_region
        %p192 = scmp.lt.s32.totalorder %s20, 0
        %s193 = scalar_select %p192, %s20, 0
        %s194 = scalar_lea.vmem %s3, %s193
      $region20: #{tpu_custom_call.1} parent=11 // pred_fallthru
        _
    $region12: #{tpu_custom_call.1} parent=5 // pred_fallthru
      _
    %p195 = scmp.lt.s32.totalorder %s10, 2
    // Predicated region
    $region21: #{tpu_custom_call.1} parent=5 // pred_check
      %p196 = pneg %p195
    $region22: #{tpu_custom_call.1} parent=5 // pred_check_branch
      %198 = sbr.rel (%p196) target = $region24
    $region23: #{tpu_custom_call.1} parent=5 // pred_region
      // Predicated region
      $region25: #{tpu_custom_call.1} parent=23 // pred_check
        %p199 = pneg %p51
      $region26: #{tpu_custom_call.1} parent=23 // pred_check_branch
        %201 = sbr.rel (%p199) target = $region28
      $region27: #{tpu_custom_call.1} parent=23 // pred_region
        %s202 = smul.u32 10, %s19
        %s203 = ssub.s32 13, %s202
        %p204 = scmp.lt.s32.totalorder %s203, 10
        %s205 = scalar_select %p204, %s203, 10
        %s206 = smul.u32 64, %s205
        %p207 = scmp.lt.s32.totalorder %s18, 1
        %s208 = scalar_select %p207, %s18, 1
        %p209 = scmp.lt.s32.totalorder %s202, 12
        %s210 = scalar_select %p209, %s202, 12
        %s211 = smul.addr %s208, 13
        %s212 = sadd.s32 %s210, %s211
        %s213 = smul.addr %s212, 4
        %s214 = scalar_lea.vmem %s0, %s213
        %s215 = smul.u32 10, %s19
        %s216 = ssub.s32 13, %s215
        %p217 = scmp.lt.s32.totalorder %s216, 10
        %s218 = scalar_select %p217, %s216, 10
        %s219 = smul.u32 64, %s218
      $region28: #{tpu_custom_call.1} parent=23 // pred_fallthru
        _
      // Predicated region
      $region29: #{tpu_custom_call.1} parent=23 // pred_check
        %p220 = pneg %p79
      $region30: #{tpu_custom_call.1} parent=23 // pred_check_branch
        %222 = sbr.rel (%p220) target = $region32
      $region31: #{tpu_custom_call.1} parent=23 // pred_region
        %p223 = scmp.lt.s32.totalorder %s18, 1
        %s224 = scalar_select %p223, %s18, 1
        %p225 = scmp.lt.s32.totalorder %s19, 0
        %s226 = scalar_select %p225, %s19, 0
        %s227 = smul.addr %s226, 3
        %s228 = smul.addr %s224, 3
        %s229 = sadd.s32 %s227, %s228
        %s230 = smul.addr %s229, 4
        %s231 = scalar_lea.vmem %s1, %s230
      $region32: #{tpu_custom_call.1} parent=23 // pred_fallthru
        _
    $region24: #{tpu_custom_call.1} parent=5 // pred_fallthru
      _
    %p232 = scmp.le.s32.totalorder 1, %s10
    %p233 = scmp.lt.s32.totalorder %s10, 3
    %p234 = pnand %p232, %p233
    %p235 = pneg %p234
    // Predicated region
    $region33: #{tpu_custom_call.1} parent=5 // pred_check
      _
    $region34: #{tpu_custom_call.1} parent=5 // pred_check_branch
      %237 = sbr.rel (%p234) target = $region36
    $region35: #{tpu_custom_call.1} parent=5 // pred_region
      %s238 = ssub.s32 %s10, 1
      %s239 = smul.u32 10, %s22
      %s240 = ssub.s32 13, %s239
      %p241 = scmp.lt.s32.totalorder %s240, 10
      %s242 = scalar_select %p241, %s240, 10
      %s243 = smul.u32 64, %s242
      %p244 = scmp.lt.s32.totalorder %s21, 1
      %s245 = scalar_select %p244, %s21, 1
      %p246 = scmp.lt.s32.totalorder %s239, 12
      %s247 = scalar_select %p246, %s239, 12
      %s248 = smul.addr %s245, 13
      %s249 = sadd.s32 %s247, %s248
      %s250 = smul.addr %s249, 4
      %s251 = scalar_lea.vmem %s0, %s250
      %p252 = pneg %p57
      %p253 = pneg %p54
      %p254 = scmp.lt.s32.totalorder %s21, 1
      %s255 = scalar_select %p254, %s21, 1
      %p256 = scmp.lt.s32.totalorder %s22, 0
      %s257 = scalar_select %p256, %s22, 0
      %s258 = smul.addr %s257, 3
      %s259 = smul.addr %s255, 3
      %s260 = sadd.s32 %s258, %s259
      %s261 = smul.addr %s260, 4
      %s262 = scalar_lea.vmem %s1, %s261
      %p263 = pneg %p85
      %p264 = pneg %p82
      %p265 = scmp.lt.s32.totalorder %s20, 0
      %s266 = scalar_select %p265, %s20, 0
      %s267 = smul.addr %s266, 4
      %s268 = scalar_lea.vmem %s2, %s267
      %p269 = pneg %p111
      %p270 = pneg %p108
      %p271 = scmp.lt.s32.totalorder %s20, 0
      %s272 = scalar_select %p271, %s20, 0
      %s273 = scalar_lea.vmem %s3, %s272
      %p274 = pneg %p137
      %p275 = pneg %p134
      %p276 = pneg %p167
      %p277 = pneg %p164
      %p278 = scmp.lt.s32.totalorder %s21, 1
      %s279 = scalar_select %p278, %s21, 1
      %p280 = scmp.lt.s32.totalorder %s22, 0
      %s281 = scalar_select %p280, %s22, 0
      %p282 = scmp.lt.s32.totalorder %s20, 0
      %s283 = scalar_select %p282, %s20, 0
      %s284 = smul.addr %s281, 10
      %s285 = sadd.s32 %s283, %s284
      %s286 = smul.addr %s279, 10
      %s287 = sadd.s32 %s285, %s286
      %s288 = smul.addr %s287, 4
      %s289 = scalar_lea.vmem %s4, %s288
      %s290 = smul.u32 10, %s22
      %s291 = ssub.s32 13, %s290
      %p292 = scmp.lt.s32.totalorder %s291, 10
      %s293 = scalar_select %p292, %s291, 10
      %s294 = smul.u32 64, %s293
      %p295 = scmp.lt.s32.totalorder %s21, 1
      %s296 = scalar_select %p295, %s21, 1
      %p297 = scmp.lt.s32.totalorder %s290, 12
      %s298 = scalar_select %p297, %s290, 12
      %s299 = smul.addr %s296, 13
      %s300 = sadd.s32 %s298, %s299
      %s301 = smul.addr %s300, 4
      %s302 = scalar_lea.vmem %s0, %s301
      %s303 = smul.u32 10, %s22
      %s304 = ssub.s32 13, %s303
      %p305 = scmp.lt.s32.totalorder %s304, 10
      %s306 = scalar_select %p305, %s304, 10
      %s307 = smul.u32 64, %s306
      %p308 = scmp.lt.s32.totalorder %s21, 1
      %s309 = scalar_select %p308, %s21, 1
      %p310 = scmp.lt.s32.totalorder %s22, 0
      %s311 = scalar_select %p310, %s22, 0
      %s312 = smul.addr %s311, 3
      %s313 = smul.addr %s309, 3
      %s314 = sadd.s32 %s312, %s313
      %s315 = smul.addr %s314, 4
      %s316 = scalar_lea.vmem %s1, %s315
      %p317 = scmp.lt.s32.totalorder %s20, 0
      %s318 = scalar_select %p317, %s20, 0
      %s319 = smul.addr %s318, 4
      %s320 = scalar_lea.vmem %s2, %s319
      %p321 = scmp.lt.s32.totalorder %s20, 0
      %s322 = scalar_select %p321, %s20, 0
      %s323 = scalar_lea.vmem %s3, %s322
      %p324 = scmp.lt.s32.totalorder %s21, 1
      %s325 = scalar_select %p324, %s21, 1
      %p326 = scmp.lt.s32.totalorder %s22, 0
      %s327 = scalar_select %p326, %s22, 0
      %p328 = scmp.lt.s32.totalorder %s20, 0
      %s329 = scalar_select %p328, %s20, 0
      %s330 = smul.addr %s327, 10
      %s331 = sadd.s32 %s329, %s330
      %s332 = smul.addr %s325, 10
      %s333 = sadd.s32 %s331, %s332
      %s334 = smul.addr %s333, 4
      %s335 = scalar_lea.vmem %s4, %s334
      %v337 = vld [vmem:[%s302] sm:$0xf]
      %v338 = vld [vmem:[%s302 + $0x4] sm:$0xf]
      %v339 = vld [vmem:[%s302 + $0x8] sm:$0xf]
      %v340 = vld [vmem:[%s302 + $0xc] sm:$0xf]
      %v341 = vld [vmem:[%s302 + $0x10] sm:$0xf]
      %v342 = vld [vmem:[%s302 + $0x14] sm:$0xf]
      %v343 = vld [vmem:[%s302 + $0x18] sm:$0xf]
      %v344 = vld [vmem:[%s302 + $0x1c] sm:$0xf]
      %v345 = vld [vmem:[%s302 + $0x20] sm:$0xf]
      %v346 = vld [vmem:[%s302 + $0x24] sm:$0xf]
      %vm347 = vcmask 125952
      %348 = vst.msk [vmem:[#allocation2] sm:$0xf] %vm347, %v337
      %349 = vst.msk [vmem:[#allocation2 + $0x4] sm:$0xf] %vm347, %v338
      %350 = vst.msk [vmem:[#allocation2 + $0x8] sm:$0xf] %vm347, %v339
      %351 = vst.msk [vmem:[#allocation2 + $0xc] sm:$0xf] %vm347, %v340
      %352 = vst.msk [vmem:[#allocation2 + $0x10] sm:$0xf] %vm347, %v341
      %353 = vst.msk [vmem:[#allocation2 + $0x14] sm:$0xf] %vm347, %v342
      %354 = vst.msk [vmem:[#allocation2 + $0x18] sm:$0xf] %vm347, %v343
      %355 = vst.msk [vmem:[#allocation2 + $0x1c] sm:$0xf] %vm347, %v344
      %356 = vst.msk [vmem:[#allocation2 + $0x20] sm:$0xf] %vm347, %v345
      %357 = vst.msk [vmem:[#allocation2 + $0x24] sm:$0xf] %vm347, %v346
      %v358 = vld [vmem:[%s316] sm:$0xf]
      %v359 = vld [vmem:[%s316 + $0x4] sm:$0xf]
      %v360 = vld [vmem:[%s316 + $0x8] sm:$0x3]
      %361 = vst.msk [vmem:[#allocation2 + $0x28] sm:$0xf] %vm347, %v358
      %362 = vst.msk [vmem:[#allocation2 + $0x2c] sm:$0xf] %vm347, %v359
      %vm363 = vcmask 123904
      %364 = vst.msk [vmem:[#allocation2 + $0x30] sm:$0x3] %vm363, %v360
      %v365 = vld [vmem:[#allocation2] sm:$0xf]
      %v366 = vld [vmem:[#allocation2 + $0x4] sm:$0xf]
      %v367 = vld [vmem:[#allocation2 + $0x8] sm:$0xf]
      %v368 = vld [vmem:[#allocation2 + $0xc] sm:$0xf]
      %v369 = vld [vmem:[#allocation2 + $0x10] sm:$0xf]
      %v370 = vld [vmem:[#allocation2 + $0x14] sm:$0xf]
      %v371 = vld [vmem:[#allocation2 + $0x18] sm:$0xf]
      %v372 = vld [vmem:[#allocation2 + $0x1c] sm:$0xf]
      %v373 = vld [vmem:[#allocation2 + $0x20] sm:$0xf]
      %v374 = vld [vmem:[#allocation2 + $0x24] sm:$0x7]
      %v375 = vld [vmem:[%s320] sm:$0xf]
      %v376 = vld [vmem:[%s320 + $0x4] sm:$0xf]
      %v387 = vunpack.c.l.b16 %v365
      %v388 = vunpack.c.l.b16 %v366
      %v389 = vunpack.c.l.b16 %v367
      %v390 = vunpack.c.l.b16 %v368
      %v391 = vunpack.c.l.b16 %v369
      %v392 = vunpack.c.l.b16 %v370
      %v393 = vunpack.c.l.b16 %v371
      %v394 = vunpack.c.l.b16 %v372
      %v395 = vunpack.c.l.b16 %v373
      %v396 = vunpack.c.l.b16 %v374
      %v397 = vpack.c.b16 %v388, %v387
      %v398 = vpack.c.b16 %v390, %v389
      %v399 = vpack.c.b16 %v392, %v391
      %v400 = vpack.c.b16 %v394, %v393
      %v401 = vpack.c.b16 %v396, %v395
      %v404 = vunpack.c.l.b16 %v375
      %v405 = vunpack.c.l.b16 %v376
      %v406 = vpack.c.b16 %v405, %v404
      %vm408 = vcmask 130048
      %v410 = vsel %vm408, %v397, 0
      %v413 = vsel %vm408, %v398, 0
      %v416 = vsel %vm408, %v399, 0
      %v419 = vsel %vm408, %v400, 0
      %v422 = vsel %vm408, %v401, 0
      %424 = vmatprep.subr.bf16.mxu0 0
      %425 = vmatpush1.bf16.msra.mxu0 0
      %426 = vmatprep.subr.bf16.mxu0 0
      %427 = vmatpush1.bf16.msra.mxu0 0
      %428 = vmatprep.subr.bf16.mxu0 0
      %429 = vmatpush1.bf16.msra.mxu0 0
      %430 = vmatprep.subr.bf16.mxu0 0
      %431 = vmatpush1.bf16.msra.mxu0 0
      %432 = vmatprep.subr.bf16.mxu0 0
      %433 = vmatpush1.bf16.msra.mxu0 0
      %434 = vmatprep.subr.bf16.mxu0 0
      %435 = vmatpush1.bf16.msra.mxu0 0
      %436 = vmatprep.subr.bf16.mxu0 0
      %437 = vmatpush1.bf16.msra.mxu0 0
      %438 = vmatprep.subr.bf16.mxu0 0
      %439 = vmatpush1.bf16.msra.mxu0 %v406
      %440 = vmatprep.subr.bf16.mxu0 0
      %441 = vmatpush2.bf16.msra.mxu0 0
      %442 = vmatprep.subr.bf16.mxu0 0
      %443 = vmatpush2.bf16.msra.mxu0 0
      %444 = vmatprep.subr.bf16.mxu0 0
      %445 = vmatpush2.bf16.msra.mxu0 0
      %446 = vmatprep.subr.bf16.mxu0 0
      %447 = vmatpush2.bf16.msra.mxu0 0
      %448 = vmatprep.subr.bf16.mxu0 0
      %449 = vmatpush2.bf16.msra.mxu0 0
      %450 = vmatprep.subr.bf16.mxu0 0
      %451 = vmatpush2.bf16.msra.mxu0 0
      %452 = vmatprep.subr.bf16.mxu0 0
      %453 = vmatpush2.bf16.msra.mxu0 0
      %454 = vmatprep.subr.bf16.mxu0 0
      %455 = vmatpush2.bf16.msra.mxu0 0
      %456 = vmatprep.mubr.bf16.mxu0 0
      %457 = vmatmul.mubr.bf16.gmra.mxu0 %v410
      %v458 = vpop.f32.mrf.mxu0
      %v459 = vadd.f32 0.0, %v458
      %v460 = vpop.f32.mrf.mxu0
      %v461 = vpop.f32.mrf.mxu0
      %v462 = vadd.f32 0.0, %v461
      %v463 = vpop.f32.mrf.mxu0
      %464 = vmatprep.mubr.bf16.mxu0 0
      %465 = vmatmul.mubr.bf16.gmra.mxu0 %v413
      %v466 = vpop.f32.mrf.mxu0
      %v467 = vadd.f32 0.0, %v466
      %v468 = vpop.f32.mrf.mxu0
      %v469 = vpop.f32.mrf.mxu0
      %v470 = vadd.f32 0.0, %v469
      %v471 = vpop.f32.mrf.mxu0
      %472 = vmatprep.mubr.bf16.mxu0 0
      %473 = vmatmul.mubr.bf16.gmra.mxu0 %v416
      %v474 = vpop.f32.mrf.mxu0
      %v475 = vadd.f32 0.0, %v474
      %v476 = vpop.f32.mrf.mxu0
      %v477 = vpop.f32.mrf.mxu0
      %v478 = vadd.f32 0.0, %v477
      %v479 = vpop.f32.mrf.mxu0
      %480 = vmatprep.mubr.bf16.mxu0 0
      %481 = vmatmul.mubr.bf16.gmra.mxu0 %v419
      %v482 = vpop.f32.mrf.mxu0
      %v483 = vadd.f32 0.0, %v482
      %v484 = vpop.f32.mrf.mxu0
      %v485 = vpop.f32.mrf.mxu0
      %v486 = vadd.f32 0.0, %v485
      %v487 = vpop.f32.mrf.mxu0
      %488 = vmatprep.mubr.bf16.mxu0 0
      %489 = vmatmul.mubr.bf16.gmra.mxu0 %v422
      %v490 = vpop.f32.mrf.mxu0
      %v491 = vadd.f32 0.0, %v490
      %v492 = vpop.f32.mrf.mxu0
      %v493 = vpop.f32.mrf.mxu0
      %v494 = vadd.f32 0.0, %v493
      %v495 = vpop.f32.mrf.mxu0
      %496 = vdwg.mxu0
      %vm497 = vcmask 261120
      %498 = vst.msk [vmem:[#allocation3] sm:$0xff] %vm497, %v459
      %499 = vst.msk [vmem:[#allocation3 + $0x8] sm:$0xff] %vm497, %v462
      %500 = vst.msk [vmem:[#allocation3 + $0x10] sm:$0xff] %vm497, %v467
      %501 = vst.msk [vmem:[#allocation3 + $0x18] sm:$0xff] %vm497, %v470
      %502 = vst.msk [vmem:[#allocation3 + $0x20] sm:$0xff] %vm497, %v475
      %503 = vst.msk [vmem:[#allocation3 + $0x28] sm:$0xff] %vm497, %v478
      %504 = vst.msk [vmem:[#allocation3 + $0x30] sm:$0xff] %vm497, %v483
      %505 = vst.msk [vmem:[#allocation3 + $0x38] sm:$0xff] %vm497, %v486
      %506 = vst.msk [vmem:[#allocation3 + $0x40] sm:$0xff] %vm497, %v491
      %vm507 = vcmask 259072
      %508 = vst.msk [vmem:[#allocation3 + $0x48] sm:$0x3f] %vm507, %v494
      %v509 = vld [vmem:[#allocation2] sm:$0xf]
      %v510 = vld [vmem:[#allocation2 + $0x4] sm:$0xf]
      %v511 = vld [vmem:[#allocation2 + $0x8] sm:$0xf]
      %v512 = vld [vmem:[#allocation2 + $0xc] sm:$0xf]
      %v513 = vld [vmem:[#allocation2 + $0x10] sm:$0xf]
      %v514 = vld [vmem:[#allocation2 + $0x14] sm:$0xf]
      %v515 = vld [vmem:[#allocation2 + $0x18] sm:$0xf]
      %v516 = vld [vmem:[#allocation2 + $0x1c] sm:$0xf]
      %v517 = vld [vmem:[#allocation2 + $0x20] sm:$0xf]
      %v518 = vld [vmem:[#allocation2 + $0x24] sm:$0xf]
      %s519 = scalar_lea.vmem %s320, 8
      %v520 = vld [vmem:[%s519] sm:$0xf]
      %v521 = vld [vmem:[%s519 + $0x4] sm:$0xf]
      %v532 = vunpack.c.l.b16 %v509
      %v533 = vunpack.c.l.b16 %v510
      %v534 = vunpack.c.l.b16 %v511
      %v535 = vunpack.c.l.b16 %v512
      %v536 = vunpack.c.l.b16 %v513
      %v537 = vunpack.c.l.b16 %v514
      %v538 = vunpack.c.l.b16 %v515
      %v539 = vunpack.c.l.b16 %v516
      %v540 = vunpack.c.l.b16 %v517
      %v541 = vunpack.c.l.b16 %v518
      %v542 = vpack.c.b16 %v533, %v532
      %v543 = vpack.c.b16 %v535, %v534
      %v544 = vpack.c.b16 %v537, %v536
      %v545 = vpack.c.b16 %v539, %v538
      %v546 = vpack.c.b16 %v541, %v540
      %vm547 = vsmask.f32 7424
      %v549 = vshrl.u32 %v542, 16
      %v551 = vshll.u32 %v542, 16
      %v553 = vrot.slane %v551, 1
      %v554 = vor.u32 %v549, %v553
      %v556 = vshll.u32 %v543, 16
      %v558 = vrot.slane %v556, 1
      %v559 = vsel %vm547, %v554, %v558
      %v560 = vshrl.u32 %v543, 16
      %v562 = vor.u32 %v560, %v558
      %v564 = vshll.u32 %v544, 16
      %v566 = vrot.slane %v564, 1
      %v567 = vsel %vm547, %v562, %v566
      %v568 = vshrl.u32 %v544, 16
      %v570 = vor.u32 %v568, %v566
      %v572 = vshll.u32 %v545, 16
      %v574 = vrot.slane %v572, 1
      %v575 = vsel %vm547, %v570, %v574
      %v576 = vshrl.u32 %v545, 16
      %v578 = vor.u32 %v576, %v574
      %v580 = vshll.u32 %v546, 16
      %v582 = vrot.slane %v580, 1
      %v583 = vsel %vm547, %v578, %v582
      %v584 = vshrl.u32 %v546, 16
      %v586 = vor.u32 %v584, %v582
      %v589 = vunpack.c.l.b16 %v520
      %v590 = vunpack.c.l.b16 %v521
      %v591 = vpack.c.b16 %v590, %v589
      %v594 = vsel %vm408, %v559, 0
      %v597 = vsel %vm408, %v567, 0
      %v600 = vsel %vm408, %v575, 0
      %v603 = vsel %vm408, %v583, 0
      %v606 = vsel %vm408, %v586, 0
      %608 = vmatprep.subr.bf16.mxu0 0
      %609 = vmatpush1.bf16.msra.mxu0 0
      %610 = vmatprep.subr.bf16.mxu0 0
      %611 = vmatpush1.bf16.msra.mxu0 0
      %612 = vmatprep.subr.bf16.mxu0 0
      %613 = vmatpush1.bf16.msra.mxu0 0
      %614 = vmatprep.subr.bf16.mxu0 0
      %615 = vmatpush1.bf16.msra.mxu0 0
      %616 = vmatprep.subr.bf16.mxu0 0
      %617 = vmatpush1.bf16.msra.mxu0 0
      %618 = vmatprep.subr.bf16.mxu0 0
      %619 = vmatpush1.bf16.msra.mxu0 0
      %620 = vmatprep.subr.bf16.mxu0 0
      %621 = vmatpush1.bf16.msra.mxu0 0
      %622 = vmatprep.subr.bf16.mxu0 0
      %623 = vmatpush1.bf16.msra.mxu0 %v591
      %624 = vmatprep.subr.bf16.mxu0 0
      %625 = vmatpush2.bf16.msra.mxu0 0
      %626 = vmatprep.subr.bf16.mxu0 0
      %627 = vmatpush2.bf16.msra.mxu0 0
      %628 = vmatprep.subr.bf16.mxu0 0
      %629 = vmatpush2.bf16.msra.mxu0 0
      %630 = vmatprep.subr.bf16.mxu0 0
      %631 = vmatpush2.bf16.msra.mxu0 0
      %632 = vmatprep.subr.bf16.mxu0 0
      %633 = vmatpush2.bf16.msra.mxu0 0
      %634 = vmatprep.subr.bf16.mxu0 0
      %635 = vmatpush2.bf16.msra.mxu0 0
      %636 = vmatprep.subr.bf16.mxu0 0
      %637 = vmatpush2.bf16.msra.mxu0 0
      %638 = vmatprep.subr.bf16.mxu0 0
      %639 = vmatpush2.bf16.msra.mxu0 0
      %640 = vmatprep.mubr.bf16.mxu0 0
      %641 = vmatmul.mubr.bf16.gmra.mxu0 %v594
      %v642 = vpop.f32.mrf.mxu0
      %v643 = vadd.f32 0.0, %v642
      %v644 = vpop.f32.mrf.mxu0
      %v645 = vpop.f32.mrf.mxu0
      %v646 = vadd.f32 0.0, %v645
      %v647 = vpop.f32.mrf.mxu0
      %648 = vmatprep.mubr.bf16.mxu0 0
      %649 = vmatmul.mubr.bf16.gmra.mxu0 %v597
      %v650 = vpop.f32.mrf.mxu0
      %v651 = vadd.f32 0.0, %v650
      %v652 = vpop.f32.mrf.mxu0
      %v653 = vpop.f32.mrf.mxu0
      %v654 = vadd.f32 0.0, %v653
      %v655 = vpop.f32.mrf.mxu0
      %656 = vmatprep.mubr.bf16.mxu0 0
      %657 = vmatmul.mubr.bf16.gmra.mxu0 %v600
      %v658 = vpop.f32.mrf.mxu0
      %v659 = vadd.f32 0.0, %v658
      %v660 = vpop.f32.mrf.mxu0
      %v661 = vpop.f32.mrf.mxu0
      %v662 = vadd.f32 0.0, %v661
      %v663 = vpop.f32.mrf.mxu0
      %664 = vmatprep.mubr.bf16.mxu0 0
      %665 = vmatmul.mubr.bf16.gmra.mxu0 %v603
      %v666 = vpop.f32.mrf.mxu0
      %v667 = vadd.f32 0.0, %v666
      %v668 = vpop.f32.mrf.mxu0
      %v669 = vpop.f32.mrf.mxu0
      %v670 = vadd.f32 0.0, %v669
      %v671 = vpop.f32.mrf.mxu0
      %672 = vmatprep.mubr.bf16.mxu0 0
      %673 = vmatmul.mubr.bf16.gmra.mxu0 %v606
      %v674 = vpop.f32.mrf.mxu0
      %v675 = vadd.f32 0.0, %v674
      %v676 = vpop.f32.mrf.mxu0
      %v677 = vpop.f32.mrf.mxu0
      %v678 = vadd.f32 0.0, %v677
      %v679 = vpop.f32.mrf.mxu0
      %680 = vdwg.mxu0
      %v681 = vld [vmem:[#allocation3] sm:$0xff]
      %v682 = vld [vmem:[#allocation3 + $0x8] sm:$0xff]
      %v683 = vld [vmem:[#allocation3 + $0x10] sm:$0xff]
      %v684 = vld [vmem:[#allocation3 + $0x18] sm:$0xff]
      %v685 = vld [vmem:[#allocation3 + $0x20] sm:$0xff]
      %v686 = vld [vmem:[#allocation3 + $0x28] sm:$0xff]
      %v687 = vld [vmem:[#allocation3 + $0x30] sm:$0xff]
      %v688 = vld [vmem:[#allocation3 + $0x38] sm:$0xff]
      %v689 = vld [vmem:[#allocation3 + $0x40] sm:$0xff]
      %v690 = vld [vmem:[#allocation3 + $0x48] sm:$0x3f]
      %v691 = vadd.f32 %v681, %v643
      %v692 = vadd.f32 %v682, %v646
      %v693 = vadd.f32 %v683, %v651
      %v694 = vadd.f32 %v684, %v654
      %v695 = vadd.f32 %v685, %v659
      %v696 = vadd.f32 %v686, %v662
      %v697 = vadd.f32 %v687, %v667
      %v698 = vadd.f32 %v688, %v670
      %v699 = vadd.f32 %v689, %v675
      %v700 = vadd.f32 %v690, %v678
      %701 = vst.msk [vmem:[#allocation3] sm:$0xff] %vm497, %v691
      %702 = vst.msk [vmem:[#allocation3 + $0x8] sm:$0xff] %vm497, %v692
      %703 = vst.msk [vmem:[#allocation3 + $0x10] sm:$0xff] %vm497, %v693
      %704 = vst.msk [vmem:[#allocation3 + $0x18] sm:$0xff] %vm497, %v694
      %705 = vst.msk [vmem:[#allocation3 + $0x20] sm:$0xff] %vm497, %v695
      %706 = vst.msk [vmem:[#allocation3 + $0x28] sm:$0xff] %vm497, %v696
      %707 = vst.msk [vmem:[#allocation3 + $0x30] sm:$0xff] %vm497, %v697
      %708 = vst.msk [vmem:[#allocation3 + $0x38] sm:$0xff] %vm497, %v698
      %709 = vst.msk [vmem:[#allocation3 + $0x40] sm:$0xff] %vm497, %v699
      %710 = vst.msk [vmem:[#allocation3 + $0x48] sm:$0x3f] %vm507, %v700
      %v711 = vld [vmem:[#allocation2] sm:$0xe]
      %v712 = vld [vmem:[#allocation2 + $0x4] sm:$0xf]
      %v713 = vld [vmem:[#allocation2 + $0x8] sm:$0xf]
      %v714 = vld [vmem:[#allocation2 + $0xc] sm:$0xf]
      %v715 = vld [vmem:[#allocation2 + $0x10] sm:$0xf]
      %v716 = vld [vmem:[#allocation2 + $0x14] sm:$0xf]
      %v717 = vld [vmem:[#allocation2 + $0x18] sm:$0xf]
      %v718 = vld [vmem:[#allocation2 + $0x1c] sm:$0xf]
      %v719 = vld [vmem:[#allocation2 + $0x20] sm:$0xf]
      %v720 = vld [vmem:[#allocation2 + $0x24] sm:$0xf]
      %s721 = scalar_lea.vmem %s320, 16
      %v722 = vld [vmem:[%s721] sm:$0xf]
      %v723 = vld [vmem:[%s721 + $0x4] sm:$0xf]
      %v734 = vunpack.c.l.b16 %v711
      %v735 = vunpack.c.l.b16 %v712
      %v736 = vunpack.c.l.b16 %v713
      %v737 = vunpack.c.l.b16 %v714
      %v738 = vunpack.c.l.b16 %v715
      %v739 = vunpack.c.l.b16 %v716
      %v740 = vunpack.c.l.b16 %v717
      %v741 = vunpack.c.l.b16 %v718
      %v742 = vunpack.c.l.b16 %v719
      %v743 = vunpack.c.l.b16 %v720
      %v744 = vpack.c.b16 %v735, %v734
      %v745 = vpack.c.b16 %v737, %v736
      %v746 = vpack.c.b16 %v739, %v738
      %v747 = vpack.c.b16 %v741, %v740
      %v748 = vpack.c.b16 %v743, %v742
      %vm749 = vcmask 1046528
      %v750 = vrot.slane %v744, 1
      %v751 = vrot.slane %v745, 1
      %v752 = vsel %vm749, %v750, %v751
      %v753 = vrot.slane %v746, 1
      %v754 = vsel %vm749, %v751, %v753
      %v755 = vrot.slane %v747, 1
      %v756 = vsel %vm749, %v753, %v755
      %v757 = vrot.slane %v748, 1
      %v758 = vsel %vm749, %v755, %v757
      %v761 = vunpack.c.l.b16 %v722
      %v762 = vunpack.c.l.b16 %v723
      %v763 = vpack.c.b16 %v762, %v761
      %v766 = vsel %vm408, %v752, 0
      %v769 = vsel %vm408, %v754, 0
      %v772 = vsel %vm408, %v756, 0
      %v775 = vsel %vm408, %v758, 0
      %v778 = vsel %vm408, %v757, 0
      %780 = vmatprep.subr.bf16.mxu0 0
      %781 = vmatpush1.bf16.msra.mxu0 0
      %782 = vmatprep.subr.bf16.mxu0 0
      %783 = vmatpush1.bf16.msra.mxu0 0
      %784 = vmatprep.subr.bf16.mxu0 0
      %785 = vmatpush1.bf16.msra.mxu0 0
      %786 = vmatprep.subr.bf16.mxu0 0
      %787 = vmatpush1.bf16.msra.mxu0 0
      %788 = vmatprep.subr.bf16.mxu0 0
      %789 = vmatpush1.bf16.msra.mxu0 0
      %790 = vmatprep.subr.bf16.mxu0 0
      %791 = vmatpush1.bf16.msra.mxu0 0
      %792 = vmatprep.subr.bf16.mxu0 0
      %793 = vmatpush1.bf16.msra.mxu0 0
      %794 = vmatprep.subr.bf16.mxu0 0
      %795 = vmatpush1.bf16.msra.mxu0 %v763
      %796 = vmatprep.subr.bf16.mxu0 0
      %797 = vmatpush2.bf16.msra.mxu0 0
      %798 = vmatprep.subr.bf16.mxu0 0
      %799 = vmatpush2.bf16.msra.mxu0 0
      %800 = vmatprep.subr.bf16.mxu0 0
      %801 = vmatpush2.bf16.msra.mxu0 0
      %802 = vmatprep.subr.bf16.mxu0 0
      %803 = vmatpush2.bf16.msra.mxu0 0
      %804 = vmatprep.subr.bf16.mxu0 0
      %805 = vmatpush2.bf16.msra.mxu0 0
      %806 = vmatprep.subr.bf16.mxu0 0
      %807 = vmatpush2.bf16.msra.mxu0 0
      %808 = vmatprep.subr.bf16.mxu0 0
      %809 = vmatpush2.bf16.msra.mxu0 0
      %810 = vmatprep.subr.bf16.mxu0 0
      %811 = vmatpush2.bf16.msra.mxu0 0
      %812 = vmatprep.mubr.bf16.mxu0 0
      %813 = vmatmul.mubr.bf16.gmra.mxu0 %v766
      %v814 = vpop.f32.mrf.mxu0
      %v815 = vadd.f32 0.0, %v814
      %v816 = vpop.f32.mrf.mxu0
      %v817 = vpop.f32.mrf.mxu0
      %v818 = vadd.f32 0.0, %v817
      %v819 = vpop.f32.mrf.mxu0
      %820 = vmatprep.mubr.bf16.mxu0 0
      %821 = vmatmul.mubr.bf16.gmra.mxu0 %v769
      %v822 = vpop.f32.mrf.mxu0
      %v823 = vadd.f32 0.0, %v822
      %v824 = vpop.f32.mrf.mxu0
      %v825 = vpop.f32.mrf.mxu0
      %v826 = vadd.f32 0.0, %v825
      %v827 = vpop.f32.mrf.mxu0
      %828 = vmatprep.mubr.bf16.mxu0 0
      %829 = vmatmul.mubr.bf16.gmra.mxu0 %v772
      %v830 = vpop.f32.mrf.mxu0
      %v831 = vadd.f32 0.0, %v830
      %v832 = vpop.f32.mrf.mxu0
      %v833 = vpop.f32.mrf.mxu0
      %v834 = vadd.f32 0.0, %v833
      %v835 = vpop.f32.mrf.mxu0
      %836 = vmatprep.mubr.bf16.mxu0 0
      %837 = vmatmul.mubr.bf16.gmra.mxu0 %v775
      %v838 = vpop.f32.mrf.mxu0
      %v839 = vadd.f32 0.0, %v838
      %v840 = vpop.f32.mrf.mxu0
      %v841 = vpop.f32.mrf.mxu0
      %v842 = vadd.f32 0.0, %v841
      %v843 = vpop.f32.mrf.mxu0
      %844 = vmatprep.mubr.bf16.mxu0 0
      %845 = vmatmul.mubr.bf16.gmra.mxu0 %v778
      %v846 = vpop.f32.mrf.mxu0
      %v847 = vadd.f32 0.0, %v846
      %v848 = vpop.f32.mrf.mxu0
      %v849 = vpop.f32.mrf.mxu0
      %v850 = vadd.f32 0.0, %v849
      %v851 = vpop.f32.mrf.mxu0
      %852 = vdwg.mxu0
      %v853 = vld [vmem:[#allocation3] sm:$0xff]
      %v854 = vld [vmem:[#allocation3 + $0x8] sm:$0xff]
      %v855 = vld [vmem:[#allocation3 + $0x10] sm:$0xff]
      %v856 = vld [vmem:[#allocation3 + $0x18] sm:$0xff]
      %v857 = vld [vmem:[#allocation3 + $0x20] sm:$0xff]
      %v858 = vld [vmem:[#allocation3 + $0x28] sm:$0xff]
      %v859 = vld [vmem:[#allocation3 + $0x30] sm:$0xff]
      %v860 = vld [vmem:[#allocation3 + $0x38] sm:$0xff]
      %v861 = vld [vmem:[#allocation3 + $0x40] sm:$0xff]
      %v862 = vld [vmem:[#allocation3 + $0x48] sm:$0x3f]
      %v863 = vadd.f32 %v853, %v815
      %v864 = vadd.f32 %v854, %v818
      %v865 = vadd.f32 %v855, %v823
      %v866 = vadd.f32 %v856, %v826
      %v867 = vadd.f32 %v857, %v831
      %v868 = vadd.f32 %v858, %v834
      %v869 = vadd.f32 %v859, %v839
      %v870 = vadd.f32 %v860, %v842
      %v871 = vadd.f32 %v861, %v847
      %v872 = vadd.f32 %v862, %v850
      %873 = vst.msk [vmem:[#allocation3] sm:$0xff] %vm497, %v863
      %874 = vst.msk [vmem:[#allocation3 + $0x8] sm:$0xff] %vm497, %v864
      %875 = vst.msk [vmem:[#allocation3 + $0x10] sm:$0xff] %vm497, %v865
      %876 = vst.msk [vmem:[#allocation3 + $0x18] sm:$0xff] %vm497, %v866
      %877 = vst.msk [vmem:[#allocation3 + $0x20] sm:$0xff] %vm497, %v867
      %878 = vst.msk [vmem:[#allocation3 + $0x28] sm:$0xff] %vm497, %v868
      %879 = vst.msk [vmem:[#allocation3 + $0x30] sm:$0xff] %vm497, %v869
      %880 = vst.msk [vmem:[#allocation3 + $0x38] sm:$0xff] %vm497, %v870
      %881 = vst.msk [vmem:[#allocation3 + $0x40] sm:$0xff] %vm497, %v871
      %882 = vst.msk [vmem:[#allocation3 + $0x48] sm:$0x3f] %vm507, %v872
      %v883 = vld [vmem:[#allocation2 + $0x4] sm:$0xe]
      %v884 = vld [vmem:[#allocation2 + $0x8] sm:$0xf]
      %v885 = vld [vmem:[#allocation2 + $0xc] sm:$0xf]
      %v886 = vld [vmem:[#allocation2 + $0x10] sm:$0xf]
      %v887 = vld [vmem:[#allocation2 + $0x14] sm:$0xf]
      %v888 = vld [vmem:[#allocation2 + $0x18] sm:$0xf]
      %v889 = vld [vmem:[#allocation2 + $0x1c] sm:$0xf]
      %v890 = vld [vmem:[#allocation2 + $0x20] sm:$0xf]
      %v891 = vld [vmem:[#allocation2 + $0x24] sm:$0xf]
      %v892 = vld [vmem:[#allocation2 + $0x28] sm:$0xf]
      %s893 = scalar_lea.vmem %s320, 24
      %v894 = vld [vmem:[%s893] sm:$0xf]
      %v895 = vld [vmem:[%s893 + $0x4] sm:$0xf]
      %v906 = vunpack.c.l.b16 %v883
      %v907 = vunpack.c.l.b16 %v884
      %v908 = vunpack.c.l.b16 %v885
      %v909 = vunpack.c.l.b16 %v886
      %v910 = vunpack.c.l.b16 %v887
      %v911 = vunpack.c.l.b16 %v888
      %v912 = vunpack.c.l.b16 %v889
      %v913 = vunpack.c.l.b16 %v890
      %v914 = vunpack.c.l.b16 %v891
      %v915 = vunpack.c.l.b16 %v892
      %v916 = vpack.c.b16 %v907, %v906
      %v917 = vpack.c.b16 %v909, %v908
      %v918 = vpack.c.b16 %v911, %v910
      %v919 = vpack.c.b16 %v913, %v912
      %v920 = vpack.c.b16 %v915, %v914
      %v921 = vrot.slane %v916, 1
      %v922 = vrot.slane %v917, 1
      %v923 = vsel %vm749, %v921, %v922
      %v924 = vrot.slane %v918, 1
      %v925 = vsel %vm749, %v922, %v924
      %v926 = vrot.slane %v919, 1
      %v927 = vsel %vm749, %v924, %v926
      %v928 = vrot.slane %v920, 1
      %v929 = vsel %vm749, %v926, %v928
      %v932 = vunpack.c.l.b16 %v894
      %v933 = vunpack.c.l.b16 %v895
      %v934 = vpack.c.b16 %v933, %v932
      %v937 = vsel %vm408, %v923, 0
      %v940 = vsel %vm408, %v925, 0
      %v943 = vsel %vm408, %v927, 0
      %v946 = vsel %vm408, %v929, 0
      %v949 = vsel %vm408, %v928, 0
      %951 = vmatprep.subr.bf16.mxu0 0
      %952 = vmatpush1.bf16.msra.mxu0 0
      %953 = vmatprep.subr.bf16.mxu0 0
      %954 = vmatpush1.bf16.msra.mxu0 0
      %955 = vmatprep.subr.bf16.mxu0 0
      %956 = vmatpush1.bf16.msra.mxu0 0
      %957 = vmatprep.subr.bf16.mxu0 0
      %958 = vmatpush1.bf16.msra.mxu0 0
      %959 = vmatprep.subr.bf16.mxu0 0
      %960 = vmatpush1.bf16.msra.mxu0 0
      %961 = vmatprep.subr.bf16.mxu0 0
      %962 = vmatpush1.bf16.msra.mxu0 0
      %963 = vmatprep.subr.bf16.mxu0 0
      %964 = vmatpush1.bf16.msra.mxu0 0
      %965 = vmatprep.subr.bf16.mxu0 0
      %966 = vmatpush1.bf16.msra.mxu0 %v934
      %967 = vmatprep.subr.bf16.mxu0 0
      %968 = vmatpush2.bf16.msra.mxu0 0
      %969 = vmatprep.subr.bf16.mxu0 0
      %970 = vmatpush2.bf16.msra.mxu0 0
      %971 = vmatprep.subr.bf16.mxu0 0
      %972 = vmatpush2.bf16.msra.mxu0 0
      %973 = vmatprep.subr.bf16.mxu0 0
      %974 = vmatpush2.bf16.msra.mxu0 0
      %975 = vmatprep.subr.bf16.mxu0 0
      %976 = vmatpush2.bf16.msra.mxu0 0
      %977 = vmatprep.subr.bf16.mxu0 0
      %978 = vmatpush2.bf16.msra.mxu0 0
      %979 = vmatprep.subr.bf16.mxu0 0
      %980 = vmatpush2.bf16.msra.mxu0 0
      %981 = vmatprep.subr.bf16.mxu0 0
      %982 = vmatpush2.bf16.msra.mxu0 0
      %983 = vmatprep.mubr.bf16.mxu0 0
      %984 = vmatmul.mubr.bf16.gmra.mxu0 %v937
      %v985 = vpop.f32.mrf.mxu0
      %v986 = vadd.f32 0.0, %v985
      %v987 = vpop.f32.mrf.mxu0
      %v988 = vpop.f32.mrf.mxu0
      %v989 = vadd.f32 0.0, %v988
      %v990 = vpop.f32.mrf.mxu0
      %991 = vmatprep.mubr.bf16.mxu0 0
      %992 = vmatmul.mubr.bf16.gmra.mxu0 %v940
      %v993 = vpop.f32.mrf.mxu0
      %v994 = vadd.f32 0.0, %v993
      %v995 = vpop.f32.mrf.mxu0
      %v996 = vpop.f32.mrf.mxu0
      %v997 = vadd.f32 0.0, %v996
      %v998 = vpop.f32.mrf.mxu0
      %999 = vmatprep.mubr.bf16.mxu0 0
      %1000 = vmatmul.mubr.bf16.gmra.mxu0 %v943
      %v1001 = vpop.f32.mrf.mxu0
      %v1002 = vadd.f32 0.0, %v1001
      %v1003 = vpop.f32.mrf.mxu0
      %v1004 = vpop.f32.mrf.mxu0
      %v1005 = vadd.f32 0.0, %v1004
      %v1006 = vpop.f32.mrf.mxu0
      %1007 = vmatprep.mubr.bf16.mxu0 0
      %1008 = vmatmul.mubr.bf16.gmra.mxu0 %v946
      %v1009 = vpop.f32.mrf.mxu0
      %v1010 = vadd.f32 0.0, %v1009
      %v1011 = vpop.f32.mrf.mxu0
      %v1012 = vpop.f32.mrf.mxu0
      %v1013 = vadd.f32 0.0, %v1012
      %v1014 = vpop.f32.mrf.mxu0
      %1015 = vmatprep.mubr.bf16.mxu0 0
      %1016 = vmatmul.mubr.bf16.gmra.mxu0 %v949
      %v1017 = vpop.f32.mrf.mxu0
      %v1018 = vadd.f32 0.0, %v1017
      %v1019 = vpop.f32.mrf.mxu0
      %v1020 = vpop.f32.mrf.mxu0
      %v1021 = vadd.f32 0.0, %v1020
      %v1022 = vpop.f32.mrf.mxu0
      %1023 = vdwg.mxu0
      %v1024 = vld [vmem:[#allocation3] sm:$0xff]
      %v1025 = vld [vmem:[#allocation3 + $0x8] sm:$0xff]
      %v1026 = vld [vmem:[#allocation3 + $0x10] sm:$0xff]
      %v1027 = vld [vmem:[#allocation3 + $0x18] sm:$0xff]
      %v1028 = vld [vmem:[#allocation3 + $0x20] sm:$0xff]
      %v1029 = vld [vmem:[#allocation3 + $0x28] sm:$0xff]
      %v1030 = vld [vmem:[#allocation3 + $0x30] sm:$0xff]
      %v1031 = vld [vmem:[#allocation3 + $0x38] sm:$0xff]
      %v1032 = vld [vmem:[#allocation3 + $0x40] sm:$0xff]
      %v1033 = vld [vmem:[#allocation3 + $0x48] sm:$0x3f]
      %v1034 = vadd.f32 %v1024, %v986
      %v1035 = vadd.f32 %v1025, %v989
      %v1036 = vadd.f32 %v1026, %v994
      %v1037 = vadd.f32 %v1027, %v997
      %v1038 = vadd.f32 %v1028, %v1002
      %v1039 = vadd.f32 %v1029, %v1005
      %v1040 = vadd.f32 %v1030, %v1010
      %v1041 = vadd.f32 %v1031, %v1013
      %v1042 = vadd.f32 %v1032, %v1018
      %v1043 = vadd.f32 %v1033, %v1021
      %1044 = vst.msk [vmem:[#allocation3] sm:$0xff] %vm497, %v1034
      %1045 = vst.msk [vmem:[#allocation3 + $0x8] sm:$0xff] %vm497, %v1035
      %1046 = vst.msk [vmem:[#allocation3 + $0x10] sm:$0xff] %vm497, %v1036
      %1047 = vst.msk [vmem:[#allocation3 + $0x18] sm:$0xff] %vm497, %v1037
      %1048 = vst.msk [vmem:[#allocation3 + $0x20] sm:$0xff] %vm497, %v1038
      %1049 = vst.msk [vmem:[#allocation3 + $0x28] sm:$0xff] %vm497, %v1039
      %1050 = vst.msk [vmem:[#allocation3 + $0x30] sm:$0xff] %vm497, %v1040
      %1051 = vst.msk [vmem:[#allocation3 + $0x38] sm:$0xff] %vm497, %v1041
      %1052 = vst.msk [vmem:[#allocation3 + $0x40] sm:$0xff] %vm497, %v1042
      %1053 = vst.msk [vmem:[#allocation3 + $0x48] sm:$0x3f] %vm507, %v1043
      %v1054 = vld [vmem:[#allocation2 + $0x4] sm:$0xe]
      %v1055 = vld [vmem:[#allocation2 + $0x8] sm:$0xf]
      %v1056 = vld [vmem:[#allocation2 + $0xc] sm:$0xf]
      %v1057 = vld [vmem:[#allocation2 + $0x10] sm:$0xf]
      %v1058 = vld [vmem:[#allocation2 + $0x14] sm:$0xf]
      %v1059 = vld [vmem:[#allocation2 + $0x18] sm:$0xf]
      %v1060 = vld [vmem:[#allocation2 + $0x1c] sm:$0xf]
      %v1061 = vld [vmem:[#allocation2 + $0x20] sm:$0xf]
      %v1062 = vld [vmem:[#allocation2 + $0x24] sm:$0xf]
      %v1063 = vld [vmem:[#allocation2 + $0x28] sm:$0xf]
      %v1064 = vld [vmem:[#allocation2 + $0x2c] sm:$0x1]
      %s1065 = scalar_lea.vmem %s320, 32
      %v1066 = vld [vmem:[%s1065] sm:$0xf]
      %v1067 = vld [vmem:[%s1065 + $0x4] sm:$0xf]
      %v1079 = vunpack.c.l.b16 %v1054
      %v1080 = vunpack.c.l.b16 %v1055
      %v1081 = vunpack.c.l.b16 %v1056
      %v1082 = vunpack.c.l.b16 %v1057
      %v1083 = vunpack.c.l.b16 %v1058
      %v1084 = vunpack.c.l.b16 %v1059
      %v1085 = vunpack.c.l.b16 %v1060
      %v1086 = vunpack.c.l.b16 %v1061
      %v1087 = vunpack.c.l.b16 %v1062
      %v1088 = vunpack.c.l.b16 %v1063
      %v1089 = vunpack.c.l.b16 %v1064
      %v1090 = vpack.c.b16 %v1080, %v1079
      %v1091 = vpack.c.b16 %v1082, %v1081
      %v1092 = vpack.c.b16 %v1084, %v1083
      %v1093 = vpack.c.b16 %v1086, %v1085
      %v1094 = vpack.c.b16 %v1088, %v1087
      %v1095 = vpack.c.b16 %v1089, %v1089
      %vm1096 = vsmask.f32 6400
      %v1098 = vshrl.u32 %v1090, 16
      %v1100 = vrot.slane %v1098, 1
      %v1101 = vshll.u32 %v1090, 16
      %v1103 = vrot.slane %v1101, 2
      %v1104 = vor.u32 %v1100, %v1103
      %v1106 = vshrl.u32 %v1091, 16
      %v1108 = vrot.slane %v1106, 1
      %v1109 = vshll.u32 %v1091, 16
      %v1111 = vrot.slane %v1109, 2
      %v1112 = vor.u32 %v1108, %v1111
      %v1113 = vsel %vm1096, %v1104, %v1112
      %v1115 = vshrl.u32 %v1092, 16
      %v1117 = vrot.slane %v1115, 1
      %v1118 = vshll.u32 %v1092, 16
      %v1120 = vrot.slane %v1118, 2
      %v1121 = vor.u32 %v1117, %v1120
      %v1122 = vsel %vm1096, %v1112, %v1121
      %v1124 = vshrl.u32 %v1093, 16
      %v1126 = vrot.slane %v1124, 1
      %v1127 = vshll.u32 %v1093, 16
      %v1129 = vrot.slane %v1127, 2
      %v1130 = vor.u32 %v1126, %v1129
      %v1131 = vsel %vm1096, %v1121, %v1130
      %v1133 = vshrl.u32 %v1094, 16
      %v1135 = vrot.slane %v1133, 1
      %v1136 = vshll.u32 %v1094, 16
      %v1138 = vrot.slane %v1136, 2
      %v1139 = vor.u32 %v1135, %v1138
      %v1140 = vsel %vm1096, %v1130, %v1139
      %v1142 = vshll.u32 %v1095, 16
      %v1144 = vrot.slane %v1142, 2
      %v1145 = vsel %vm1096, %v1139, %v1144
      %v1148 = vunpack.c.l.b16 %v1066
      %v1149 = vunpack.c.l.b16 %v1067
      %v1150 = vpack.c.b16 %v1149, %v1148
      %v1153 = vsel %vm408, %v1113, 0
      %v1156 = vsel %vm408, %v1122, 0
      %v1159 = vsel %vm408, %v1131, 0
      %v1162 = vsel %vm408, %v1140, 0
      %v1165 = vsel %vm408, %v1145, 0
      %1167 = vmatprep.subr.bf16.mxu0 0
      %1168 = vmatpush1.bf16.msra.mxu0 0
      %1169 = vmatprep.subr.bf16.mxu0 0
      %1170 = vmatpush1.bf16.msra.mxu0 0
      %1171 = vmatprep.subr.bf16.mxu0 0
      %1172 = vmatpush1.bf16.msra.mxu0 0
      %1173 = vmatprep.subr.bf16.mxu0 0
      %1174 = vmatpush1.bf16.msra.mxu0 0
      %1175 = vmatprep.subr.bf16.mxu0 0
      %1176 = vmatpush1.bf16.msra.mxu0 0
      %1177 = vmatprep.subr.bf16.mxu0 0
      %1178 = vmatpush1.bf16.msra.mxu0 0
      %1179 = vmatprep.subr.bf16.mxu0 0
      %1180 = vmatpush1.bf16.msra.mxu0 0
      %1181 = vmatprep.subr.bf16.mxu0 0
      %1182 = vmatpush1.bf16.msra.mxu0 %v1150
      %1183 = vmatprep.subr.bf16.mxu0 0
      %1184 = vmatpush2.bf16.msra.mxu0 0
      %1185 = vmatprep.subr.bf16.mxu0 0
      %1186 = vmatpush2.bf16.msra.mxu0 0
      %1187 = vmatprep.subr.bf16.mxu0 0
      %1188 = vmatpush2.bf16.msra.mxu0 0
      %1189 = vmatprep.subr.bf16.mxu0 0
      %1190 = vmatpush2.bf16.msra.mxu0 0
      %1191 = vmatprep.subr.bf16.mxu0 0
      %1192 = vmatpush2.bf16.msra.mxu0 0
      %1193 = vmatprep.subr.bf16.mxu0 0
      %1194 = vmatpush2.bf16.msra.mxu0 0
      %1195 = vmatprep.subr.bf16.mxu0 0
      %1196 = vmatpush2.bf16.msra.mxu0 0
      %1197 = vmatprep.subr.bf16.mxu0 0
      %1198 = vmatpush2.bf16.msra.mxu0 0
      %1199 = vmatprep.mubr.bf16.mxu0 0
      %1200 = vmatmul.mubr.bf16.gmra.mxu0 %v1153
      %v1201 = vpop.f32.mrf.mxu0
      %v1202 = vadd.f32 0.0, %v1201
      %v1203 = vpop.f32.mrf.mxu0
      %v1204 = vpop.f32.mrf.mxu0
      %v1205 = vadd.f32 0.0, %v1204
      %v1206 = vpop.f32.mrf.mxu0
      %1207 = vmatprep.mubr.bf16.mxu0 0
      %1208 = vmatmul.mubr.bf16.gmra.mxu0 %v1156
      %v1209 = vpop.f32.mrf.mxu0
      %v1210 = vadd.f32 0.0, %v1209
      %v1211 = vpop.f32.mrf.mxu0
      %v1212 = vpop.f32.mrf.mxu0
      %v1213 = vadd.f32 0.0, %v1212
      %v1214 = vpop.f32.mrf.mxu0
      %1215 = vmatprep.mubr.bf16.mxu0 0
      %1216 = vmatmul.mubr.bf16.gmra.mxu0 %v1159
      %v1217 = vpop.f32.mrf.mxu0
      %v1218 = vadd.f32 0.0, %v1217
      %v1219 = vpop.f32.mrf.mxu0
      %v1220 = vpop.f32.mrf.mxu0
      %v1221 = vadd.f32 0.0, %v1220
      %v1222 = vpop.f32.mrf.mxu0
      %1223 = vmatprep.mubr.bf16.mxu0 0
      %1224 = vmatmul.mubr.bf16.gmra.mxu0 %v1162
      %v1225 = vpop.f32.mrf.mxu0
      %v1226 = vadd.f32 0.0, %v1225
      %v1227 = vpop.f32.mrf.mxu0
      %v1228 = vpop.f32.mrf.mxu0
      %v1229 = vadd.f32 0.0, %v1228
      %v1230 = vpop.f32.mrf.mxu0
      %1231 = vmatprep.mubr.bf16.mxu0 0
      %1232 = vmatmul.mubr.bf16.gmra.mxu0 %v1165
      %v1233 = vpop.f32.mrf.mxu0
      %v1234 = vadd.f32 0.0, %v1233
      %v1235 = vpop.f32.mrf.mxu0
      %v1236 = vpop.f32.mrf.mxu0
      %v1237 = vadd.f32 0.0, %v1236
      %v1238 = vpop.f32.mrf.mxu0
      %1239 = vdwg.mxu0
      %v1240 = vld [vmem:[#allocation3] sm:$0xff]
      %v1241 = vld [vmem:[#allocation3 + $0x8] sm:$0xff]
      %v1242 = vld [vmem:[#allocation3 + $0x10] sm:$0xff]
      %v1243 = vld [vmem:[#allocation3 + $0x18] sm:$0xff]
      %v1244 = vld [vmem:[#allocation3 + $0x20] sm:$0xff]
      %v1245 = vld [vmem:[#allocation3 + $0x28] sm:$0xff]
      %v1246 = vld [vmem:[#allocation3 + $0x30] sm:$0xff]
      %v1247 = vld [vmem:[#allocation3 + $0x38] sm:$0xff]
      %v1248 = vld [vmem:[#allocation3 + $0x40] sm:$0xff]
      %v1249 = vld [vmem:[#allocation3 + $0x48] sm:$0x3f]
      %v1250 = vadd.f32 %v1240, %v1202
      %v1251 = vadd.f32 %v1241, %v1205
      %v1252 = vadd.f32 %v1242, %v1210
      %v1253 = vadd.f32 %v1243, %v1213
      %v1254 = vadd.f32 %v1244, %v1218
      %v1255 = vadd.f32 %v1245, %v1221
      %v1256 = vadd.f32 %v1246, %v1226
      %v1257 = vadd.f32 %v1247, %v1229
      %v1258 = vadd.f32 %v1248, %v1234
      %v1259 = vadd.f32 %v1249, %v1237
      %1260 = vst.msk [vmem:[#allocation3] sm:$0xff] %vm497, %v1250
      %1261 = vst.msk [vmem:[#allocation3 + $0x8] sm:$0xff] %vm497, %v1251
      %1262 = vst.msk [vmem:[#allocation3 + $0x10] sm:$0xff] %vm497, %v1252
      %1263 = vst.msk [vmem:[#allocation3 + $0x18] sm:$0xff] %vm497, %v1253
      %1264 = vst.msk [vmem:[#allocation3 + $0x20] sm:$0xff] %vm497, %v1254
      %1265 = vst.msk [vmem:[#allocation3 + $0x28] sm:$0xff] %vm497, %v1255
      %1266 = vst.msk [vmem:[#allocation3 + $0x30] sm:$0xff] %vm497, %v1256
      %1267 = vst.msk [vmem:[#allocation3 + $0x38] sm:$0xff] %vm497, %v1257
      %1268 = vst.msk [vmem:[#allocation3 + $0x40] sm:$0xff] %vm497, %v1258
      %1269 = vst.msk [vmem:[#allocation3 + $0x48] sm:$0x3f] %vm507, %v1259
      %v1270 = vld [vmem:[#allocation2 + $0x4] sm:$0xc]
      %v1271 = vld [vmem:[#allocation2 + $0x8] sm:$0xf]
      %v1272 = vld [vmem:[#allocation2 + $0xc] sm:$0xf]
      %v1273 = vld [vmem:[#allocation2 + $0x10] sm:$0xf]
      %v1274 = vld [vmem:[#allocation2 + $0x14] sm:$0xf]
      %v1275 = vld [vmem:[#allocation2 + $0x18] sm:$0xf]
      %v1276 = vld [vmem:[#allocation2 + $0x1c] sm:$0xf]
      %v1277 = vld [vmem:[#allocation2 + $0x20] sm:$0xf]
      %v1278 = vld [vmem:[#allocation2 + $0x24] sm:$0xf]
      %v1279 = vld [vmem:[#allocation2 + $0x28] sm:$0xf]
      %v1280 = vld [vmem:[#allocation2 + $0x2c] sm:$0x1]
      %s1281 = scalar_lea.vmem %s320, 40
      %v1282 = vld [vmem:[%s1281] sm:$0xf]
      %v1283 = vld [vmem:[%s1281 + $0x4] sm:$0xf]
      %v1295 = vunpack.c.l.b16 %v1270
      %v1296 = vunpack.c.l.b16 %v1271
      %v1297 = vunpack.c.l.b16 %v1272
      %v1298 = vunpack.c.l.b16 %v1273
      %v1299 = vunpack.c.l.b16 %v1274
      %v1300 = vunpack.c.l.b16 %v1275
      %v1301 = vunpack.c.l.b16 %v1276
      %v1302 = vunpack.c.l.b16 %v1277
      %v1303 = vunpack.c.l.b16 %v1278
      %v1304 = vunpack.c.l.b16 %v1279
      %v1305 = vunpack.c.l.b16 %v1280
      %v1306 = vpack.c.b16 %v1296, %v1295
      %v1307 = vpack.c.b16 %v1298, %v1297
      %v1308 = vpack.c.b16 %v1300, %v1299
      %v1309 = vpack.c.b16 %v1302, %v1301
      %v1310 = vpack.c.b16 %v1304, %v1303
      %v1311 = vpack.c.b16 %v1305, %v1305
      %vm1312 = vcmask 1045504
      %v1313 = vrot.slane %v1306, 2
      %v1314 = vrot.slane %v1307, 2
      %v1315 = vsel %vm1312, %v1313, %v1314
      %v1316 = vrot.slane %v1308, 2
      %v1317 = vsel %vm1312, %v1314, %v1316
      %v1318 = vrot.slane %v1309, 2
      %v1319 = vsel %vm1312, %v1316, %v1318
      %v1320 = vrot.slane %v1310, 2
      %v1321 = vsel %vm1312, %v1318, %v1320
      %v1322 = vrot.slane %v1311, 2
      %v1323 = vsel %vm1312, %v1320, %v1322
      %v1326 = vunpack.c.l.b16 %v1282
      %v1327 = vunpack.c.l.b16 %v1283
      %v1328 = vpack.c.b16 %v1327, %v1326
      %v1331 = vsel %vm408, %v1315, 0
      %v1334 = vsel %vm408, %v1317, 0
      %v1337 = vsel %vm408, %v1319, 0
      %v1340 = vsel %vm408, %v1321, 0
      %v1343 = vsel %vm408, %v1323, 0
      %1345 = vmatprep.subr.bf16.mxu0 0
      %1346 = vmatpush1.bf16.msra.mxu0 0
      %1347 = vmatprep.subr.bf16.mxu0 0
      %1348 = vmatpush1.bf16.msra.mxu0 0
      %1349 = vmatprep.subr.bf16.mxu0 0
      %1350 = vmatpush1.bf16.msra.mxu0 0
      %1351 = vmatprep.subr.bf16.mxu0 0
      %1352 = vmatpush1.bf16.msra.mxu0 0
      %1353 = vmatprep.subr.bf16.mxu0 0
      %1354 = vmatpush1.bf16.msra.mxu0 0
      %1355 = vmatprep.subr.bf16.mxu0 0
      %1356 = vmatpush1.bf16.msra.mxu0 0
      %1357 = vmatprep.subr.bf16.mxu0 0
      %1358 = vmatpush1.bf16.msra.mxu0 0
      %1359 = vmatprep.subr.bf16.mxu0 0
      %1360 = vmatpush1.bf16.msra.mxu0 %v1328
      %1361 = vmatprep.subr.bf16.mxu0 0
      %1362 = vmatpush2.bf16.msra.mxu0 0
      %1363 = vmatprep.subr.bf16.mxu0 0
      %1364 = vmatpush2.bf16.msra.mxu0 0
      %1365 = vmatprep.subr.bf16.mxu0 0
      %1366 = vmatpush2.bf16.msra.mxu0 0
      %1367 = vmatprep.subr.bf16.mxu0 0
      %1368 = vmatpush2.bf16.msra.mxu0 0
      %1369 = vmatprep.subr.bf16.mxu0 0
      %1370 = vmatpush2.bf16.msra.mxu0 0
      %1371 = vmatprep.subr.bf16.mxu0 0
      %1372 = vmatpush2.bf16.msra.mxu0 0
      %1373 = vmatprep.subr.bf16.mxu0 0
      %1374 = vmatpush2.bf16.msra.mxu0 0
      %1375 = vmatprep.subr.bf16.mxu0 0
      %1376 = vmatpush2.bf16.msra.mxu0 0
      %1377 = vmatprep.mubr.bf16.mxu0 0
      %1378 = vmatmul.mubr.bf16.gmra.mxu0 %v1331
      %v1379 = vpop.f32.mrf.mxu0
      %v1380 = vadd.f32 0.0, %v1379
      %v1381 = vpop.f32.mrf.mxu0
      %v1382 = vpop.f32.mrf.mxu0
      %v1383 = vadd.f32 0.0, %v1382
      %v1384 = vpop.f32.mrf.mxu0
      %1385 = vmatprep.mubr.bf16.mxu0 0
      %1386 = vmatmul.mubr.bf16.gmra.mxu0 %v1334
      %v1387 = vpop.f32.mrf.mxu0
      %v1388 = vadd.f32 0.0, %v1387
      %v1389 = vpop.f32.mrf.mxu0
      %v1390 = vpop.f32.mrf.mxu0
      %v1391 = vadd.f32 0.0, %v1390
      %v1392 = vpop.f32.mrf.mxu0
      %1393 = vmatprep.mubr.bf16.mxu0 0
      %1394 = vmatmul.mubr.bf16.gmra.mxu0 %v1337
      %v1395 = vpop.f32.mrf.mxu0
      %v1396 = vadd.f32 0.0, %v1395
      %v1397 = vpop.f32.mrf.mxu0
      %v1398 = vpop.f32.mrf.mxu0
      %v1399 = vadd.f32 0.0, %v1398
      %v1400 = vpop.f32.mrf.mxu0
      %1401 = vmatprep.mubr.bf16.mxu0 0
      %1402 = vmatmul.mubr.bf16.gmra.mxu0 %v1340
      %v1403 = vpop.f32.mrf.mxu0
      %v1404 = vadd.f32 0.0, %v1403
      %v1405 = vpop.f32.mrf.mxu0
      %v1406 = vpop.f32.mrf.mxu0
      %v1407 = vadd.f32 0.0, %v1406
      %v1408 = vpop.f32.mrf.mxu0
      %1409 = vmatprep.mubr.bf16.mxu0 0
      %1410 = vmatmul.mubr.bf16.gmra.mxu0 %v1343
      %v1411 = vpop.f32.mrf.mxu0
      %v1412 = vadd.f32 0.0, %v1411
      %v1413 = vpop.f32.mrf.mxu0
      %v1414 = vpop.f32.mrf.mxu0
      %v1415 = vadd.f32 0.0, %v1414
      %v1416 = vpop.f32.mrf.mxu0
      %1417 = vdwg.mxu0
      %v1418 = vld [vmem:[#allocation3] sm:$0xff]
      %v1419 = vld [vmem:[#allocation3 + $0x8] sm:$0xff]
      %v1420 = vld [vmem:[#allocation3 + $0x10] sm:$0xff]
      %v1421 = vld [vmem:[#allocation3 + $0x18] sm:$0xff]
      %v1422 = vld [vmem:[#allocation3 + $0x20] sm:$0xff]
      %v1423 = vld [vmem:[#allocation3 + $0x28] sm:$0xff]
      %v1424 = vld [vmem:[#allocation3 + $0x30] sm:$0xff]
      %v1425 = vld [vmem:[#allocation3 + $0x38] sm:$0xff]
      %v1426 = vld [vmem:[#allocation3 + $0x40] sm:$0xff]
      %v1427 = vld [vmem:[#allocation3 + $0x48] sm:$0x3f]
      %v1428 = vadd.f32 %v1418, %v1380
      %v1429 = vadd.f32 %v1419, %v1383
      %v1430 = vadd.f32 %v1420, %v1388
      %v1431 = vadd.f32 %v1421, %v1391
      %v1432 = vadd.f32 %v1422, %v1396
      %v1433 = vadd.f32 %v1423, %v1399
      %v1434 = vadd.f32 %v1424, %v1404
      %v1435 = vadd.f32 %v1425, %v1407
      %v1436 = vadd.f32 %v1426, %v1412
      %v1437 = vadd.f32 %v1427, %v1415
      %1438 = vst.msk [vmem:[#allocation3] sm:$0xff] %vm497, %v1428
      %1439 = vst.msk [vmem:[#allocation3 + $0x8] sm:$0xff] %vm497, %v1429
      %1440 = vst.msk [vmem:[#allocation3 + $0x10] sm:$0xff] %vm497, %v1430
      %1441 = vst.msk [vmem:[#allocation3 + $0x18] sm:$0xff] %vm497, %v1431
      %1442 = vst.msk [vmem:[#allocation3 + $0x20] sm:$0xff] %vm497, %v1432
      %1443 = vst.msk [vmem:[#allocation3 + $0x28] sm:$0xff] %vm497, %v1433
      %1444 = vst.msk [vmem:[#allocation3 + $0x30] sm:$0xff] %vm497, %v1434
      %1445 = vst.msk [vmem:[#allocation3 + $0x38] sm:$0xff] %vm497, %v1435
      %1446 = vst.msk [vmem:[#allocation3 + $0x40] sm:$0xff] %vm497, %v1436
      %1447 = vst.msk [vmem:[#allocation3 + $0x48] sm:$0x3f] %vm507, %v1437
      %v1448 = vld [vmem:[#allocation2 + $0x8] sm:$0xc]
      %v1449 = vld [vmem:[#allocation2 + $0xc] sm:$0xf]
      %v1450 = vld [vmem:[#allocation2 + $0x10] sm:$0xf]
      %v1451 = vld [vmem:[#allocation2 + $0x14] sm:$0xf]
      %v1452 = vld [vmem:[#allocation2 + $0x18] sm:$0xf]
      %v1453 = vld [vmem:[#allocation2 + $0x1c] sm:$0xf]
      %v1454 = vld [vmem:[#allocation2 + $0x20] sm:$0xf]
      %v1455 = vld [vmem:[#allocation2 + $0x24] sm:$0xf]
      %v1456 = vld [vmem:[#allocation2 + $0x28] sm:$0xf]
      %v1457 = vld [vmem:[#allocation2 + $0x2c] sm:$0xf]
      %v1458 = vld [vmem:[#allocation2 + $0x30] sm:$0x1]
      %s1459 = scalar_lea.vmem %s320, 48
      %v1460 = vld [vmem:[%s1459] sm:$0xf]
      %v1461 = vld [vmem:[%s1459 + $0x4] sm:$0xf]
      %v1473 = vunpack.c.l.b16 %v1448
      %v1474 = vunpack.c.l.b16 %v1449
      %v1475 = vunpack.c.l.b16 %v1450
      %v1476 = vunpack.c.l.b16 %v1451
      %v1477 = vunpack.c.l.b16 %v1452
      %v1478 = vunpack.c.l.b16 %v1453
      %v1479 = vunpack.c.l.b16 %v1454
      %v1480 = vunpack.c.l.b16 %v1455
      %v1481 = vunpack.c.l.b16 %v1456
      %v1482 = vunpack.c.l.b16 %v1457
      %v1483 = vunpack.c.l.b16 %v1458
      %v1484 = vpack.c.b16 %v1474, %v1473
      %v1485 = vpack.c.b16 %v1476, %v1475
      %v1486 = vpack.c.b16 %v1478, %v1477
      %v1487 = vpack.c.b16 %v1480, %v1479
      %v1488 = vpack.c.b16 %v1482, %v1481
      %v1489 = vpack.c.b16 %v1483, %v1483
      %v1490 = vrot.slane %v1484, 2
      %v1491 = vrot.slane %v1485, 2
      %v1492 = vsel %vm1312, %v1490, %v1491
      %v1493 = vrot.slane %v1486, 2
      %v1494 = vsel %vm1312, %v1491, %v1493
      %v1495 = vrot.slane %v1487, 2
      %v1496 = vsel %vm1312, %v1493, %v1495
      %v1497 = vrot.slane %v1488, 2
      %v1498 = vsel %vm1312, %v1495, %v1497
      %v1499 = vrot.slane %v1489, 2
      %v1500 = vsel %vm1312, %v1497, %v1499
      %v1503 = vunpack.c.l.b16 %v1460
      %v1504 = vunpack.c.l.b16 %v1461
      %v1505 = vpack.c.b16 %v1504, %v1503
      %v1508 = vsel %vm408, %v1492, 0
      %v1511 = vsel %vm408, %v1494, 0
      %v1514 = vsel %vm408, %v1496, 0
      %v1517 = vsel %vm408, %v1498, 0
      %v1520 = vsel %vm408, %v1500, 0
      %1522 = vmatprep.subr.bf16.mxu0 0
      %1523 = vmatpush1.bf16.msra.mxu0 0
      %1524 = vmatprep.subr.bf16.mxu0 0
      %1525 = vmatpush1.bf16.msra.mxu0 0
      %1526 = vmatprep.subr.bf16.mxu0 0
      %1527 = vmatpush1.bf16.msra.mxu0 0
      %1528 = vmatprep.subr.bf16.mxu0 0
      %1529 = vmatpush1.bf16.msra.mxu0 0
      %1530 = vmatprep.subr.bf16.mxu0 0
      %1531 = vmatpush1.bf16.msra.mxu0 0
      %1532 = vmatprep.subr.bf16.mxu0 0
      %1533 = vmatpush1.bf16.msra.mxu0 0
      %1534 = vmatprep.subr.bf16.mxu0 0
      %1535 = vmatpush1.bf16.msra.mxu0 0
      %1536 = vmatprep.subr.bf16.mxu0 0
      %1537 = vmatpush1.bf16.msra.mxu0 %v1505
      %1538 = vmatprep.subr.bf16.mxu0 0
      %1539 = vmatpush2.bf16.msra.mxu0 0
      %1540 = vmatprep.subr.bf16.mxu0 0
      %1541 = vmatpush2.bf16.msra.mxu0 0
      %1542 = vmatprep.subr.bf16.mxu0 0
      %1543 = vmatpush2.bf16.msra.mxu0 0
      %1544 = vmatprep.subr.bf16.mxu0 0
      %1545 = vmatpush2.bf16.msra.mxu0 0
      %1546 = vmatprep.subr.bf16.mxu0 0
      %1547 = vmatpush2.bf16.msra.mxu0 0
      %1548 = vmatprep.subr.bf16.mxu0 0
      %1549 = vmatpush2.bf16.msra.mxu0 0
      %1550 = vmatprep.subr.bf16.mxu0 0
      %1551 = vmatpush2.bf16.msra.mxu0 0
      %1552 = vmatprep.subr.bf16.mxu0 0
      %1553 = vmatpush2.bf16.msra.mxu0 0
      %1554 = vmatprep.mubr.bf16.mxu0 0
      %1555 = vmatmul.mubr.bf16.gmra.mxu0 %v1508
      %v1556 = vpop.f32.mrf.mxu0
      %v1557 = vadd.f32 0.0, %v1556
      %v1558 = vpop.f32.mrf.mxu0
      %v1559 = vpop.f32.mrf.mxu0
      %v1560 = vadd.f32 0.0, %v1559
      %v1561 = vpop.f32.mrf.mxu0
      %1562 = vmatprep.mubr.bf16.mxu0 0
      %1563 = vmatmul.mubr.bf16.gmra.mxu0 %v1511
      %v1564 = vpop.f32.mrf.mxu0
      %v1565 = vadd.f32 0.0, %v1564
      %v1566 = vpop.f32.mrf.mxu0
      %v1567 = vpop.f32.mrf.mxu0
      %v1568 = vadd.f32 0.0, %v1567
      %v1569 = vpop.f32.mrf.mxu0
      %1570 = vmatprep.mubr.bf16.mxu0 0
      %1571 = vmatmul.mubr.bf16.gmra.mxu0 %v1514
      %v1572 = vpop.f32.mrf.mxu0
      %v1573 = vadd.f32 0.0, %v1572
      %v1574 = vpop.f32.mrf.mxu0
      %v1575 = vpop.f32.mrf.mxu0
      %v1576 = vadd.f32 0.0, %v1575
      %v1577 = vpop.f32.mrf.mxu0
      %1578 = vmatprep.mubr.bf16.mxu0 0
      %1579 = vmatmul.mubr.bf16.gmra.mxu0 %v1517
      %v1580 = vpop.f32.mrf.mxu0
      %v1581 = vadd.f32 0.0, %v1580
      %v1582 = vpop.f32.mrf.mxu0
      %v1583 = vpop.f32.mrf.mxu0
      %v1584 = vadd.f32 0.0, %v1583
      %v1585 = vpop.f32.mrf.mxu0
      %1586 = vmatprep.mubr.bf16.mxu0 0
      %1587 = vmatmul.mubr.bf16.gmra.mxu0 %v1520
      %v1588 = vpop.f32.mrf.mxu0
      %v1589 = vadd.f32 0.0, %v1588
      %v1590 = vpop.f32.mrf.mxu0
      %v1591 = vpop.f32.mrf.mxu0
      %v1592 = vadd.f32 0.0, %v1591
      %v1593 = vpop.f32.mrf.mxu0
      %1594 = vdwg.mxu0
      %v1595 = vld [vmem:[#allocation3] sm:$0xff]
      %v1596 = vld [vmem:[#allocation3 + $0x8] sm:$0xff]
      %v1597 = vld [vmem:[#allocation3 + $0x10] sm:$0xff]
      %v1598 = vld [vmem:[#allocation3 + $0x18] sm:$0xff]
      %v1599 = vld [vmem:[#allocation3 + $0x20] sm:$0xff]
      %v1600 = vld [vmem:[#allocation3 + $0x28] sm:$0xff]
      %v1601 = vld [vmem:[#allocation3 + $0x30] sm:$0xff]
      %v1602 = vld [vmem:[#allocation3 + $0x38] sm:$0xff]
      %v1603 = vld [vmem:[#allocation3 + $0x40] sm:$0xff]
      %v1604 = vld [vmem:[#allocation3 + $0x48] sm:$0x3f]
      %v1605 = vadd.f32 %v1595, %v1557
      %v1606 = vadd.f32 %v1596, %v1560
      %v1607 = vadd.f32 %v1597, %v1565
      %v1608 = vadd.f32 %v1598, %v1568
      %v1609 = vadd.f32 %v1599, %v1573
      %v1610 = vadd.f32 %v1600, %v1576
      %v1611 = vadd.f32 %v1601, %v1581
      %v1612 = vadd.f32 %v1602, %v1584
      %v1613 = vadd.f32 %v1603, %v1589
      %v1614 = vadd.f32 %v1604, %v1592
      %1615 = vst.msk [vmem:[#allocation3] sm:$0xff] %vm497, %v1605
      %1616 = vst.msk [vmem:[#allocation3 + $0x8] sm:$0xff] %vm497, %v1606
      %1617 = vst.msk [vmem:[#allocation3 + $0x10] sm:$0xff] %vm497, %v1607
      %1618 = vst.msk [vmem:[#allocation3 + $0x18] sm:$0xff] %vm497, %v1608
      %1619 = vst.msk [vmem:[#allocation3 + $0x20] sm:$0xff] %vm497, %v1609
      %1620 = vst.msk [vmem:[#allocation3 + $0x28] sm:$0xff] %vm497, %v1610
      %1621 = vst.msk [vmem:[#allocation3 + $0x30] sm:$0xff] %vm497, %v1611
      %1622 = vst.msk [vmem:[#allocation3 + $0x38] sm:$0xff] %vm497, %v1612
      %1623 = vst.msk [vmem:[#allocation3 + $0x40] sm:$0xff] %vm497, %v1613
      %1624 = vst.msk [vmem:[#allocation3 + $0x48] sm:$0x3f] %vm507, %v1614
      %v1625 = vld [vmem:[#allocation2 + $0x8] sm:$0xc]
      %v1626 = vld [vmem:[#allocation2 + $0xc] sm:$0xf]
      %v1627 = vld [vmem:[#allocation2 + $0x10] sm:$0xf]
      %v1628 = vld [vmem:[#allocation2 + $0x14] sm:$0xf]
      %v1629 = vld [vmem:[#allocation2 + $0x18] sm:$0xf]
      %v1630 = vld [vmem:[#allocation2 + $0x1c] sm:$0xf]
      %v1631 = vld [vmem:[#allocation2 + $0x20] sm:$0xf]
      %v1632 = vld [vmem:[#allocation2 + $0x24] sm:$0xf]
      %v1633 = vld [vmem:[#allocation2 + $0x28] sm:$0xf]
      %v1634 = vld [vmem:[#allocation2 + $0x2c] sm:$0xf]
      %v1635 = vld [vmem:[#allocation2 + $0x30] sm:$0x3]
      %s1636 = scalar_lea.vmem %s320, 56
      %v1637 = vld [vmem:[%s1636] sm:$0xf]
      %v1638 = vld [vmem:[%s1636 + $0x4] sm:$0xf]
      %v1650 = vunpack.c.l.b16 %v1625
      %v1651 = vunpack.c.l.b16 %v1626
      %v1652 = vunpack.c.l.b16 %v1627
      %v1653 = vunpack.c.l.b16 %v1628
      %v1654 = vunpack.c.l.b16 %v1629
      %v1655 = vunpack.c.l.b16 %v1630
      %v1656 = vunpack.c.l.b16 %v1631
      %v1657 = vunpack.c.l.b16 %v1632
      %v1658 = vunpack.c.l.b16 %v1633
      %v1659 = vunpack.c.l.b16 %v1634
      %v1660 = vunpack.c.l.b16 %v1635
      %v1661 = vpack.c.b16 %v1651, %v1650
      %v1662 = vpack.c.b16 %v1653, %v1652
      %v1663 = vpack.c.b16 %v1655, %v1654
      %v1664 = vpack.c.b16 %v1657, %v1656
      %v1665 = vpack.c.b16 %v1659, %v1658
      %v1666 = vpack.c.b16 %v1660, %v1660
      %vm1667 = vsmask.f32 5376
      %v1669 = vshrl.u32 %v1661, 16
      %v1671 = vrot.slane %v1669, 2
      %v1672 = vshll.u32 %v1661, 16
      %v1674 = vrot.slane %v1672, 3
      %v1675 = vor.u32 %v1671, %v1674
      %v1677 = vshrl.u32 %v1662, 16
      %v1679 = vrot.slane %v1677, 2
      %v1680 = vshll.u32 %v1662, 16
      %v1682 = vrot.slane %v1680, 3
      %v1683 = vor.u32 %v1679, %v1682
      %v1684 = vsel %vm1667, %v1675, %v1683
      %v1686 = vshrl.u32 %v1663, 16
      %v1688 = vrot.slane %v1686, 2
      %v1689 = vshll.u32 %v1663, 16
      %v1691 = vrot.slane %v1689, 3
      %v1692 = vor.u32 %v1688, %v1691
      %v1693 = vsel %vm1667, %v1683, %v1692
      %v1695 = vshrl.u32 %v1664, 16
      %v1697 = vrot.slane %v1695, 2
      %v1698 = vshll.u32 %v1664, 16
      %v1700 = vrot.slane %v1698, 3
      %v1701 = vor.u32 %v1697, %v1700
      %v1702 = vsel %vm1667, %v1692, %v1701
      %v1704 = vshrl.u32 %v1665, 16
      %v1706 = vrot.slane %v1704, 2
      %v1707 = vshll.u32 %v1665, 16
      %v1709 = vrot.slane %v1707, 3
      %v1710 = vor.u32 %v1706, %v1709
      %v1711 = vsel %vm1667, %v1701, %v1710
      %v1713 = vshrl.u32 %v1666, 16
      %v1715 = vrot.slane %v1713, 2
      %v1716 = vshll.u32 %v1666, 16
      %v1718 = vrot.slane %v1716, 3
      %v1719 = vor.u32 %v1715, %v1718
      %v1720 = vsel %vm1667, %v1710, %v1719
      %v1723 = vunpack.c.l.b16 %v1637
      %v1724 = vunpack.c.l.b16 %v1638
      %v1725 = vpack.c.b16 %v1724, %v1723
      %v1728 = vsel %vm408, %v1684, 0
      %v1731 = vsel %vm408, %v1693, 0
      %v1734 = vsel %vm408, %v1702, 0
      %v1737 = vsel %vm408, %v1711, 0
      %v1740 = vsel %vm408, %v1720, 0
      %1742 = vmatprep.subr.bf16.mxu0 0
      %1743 = vmatpush1.bf16.msra.mxu0 0
      %1744 = vmatprep.subr.bf16.mxu0 0
      %1745 = vmatpush1.bf16.msra.mxu0 0
      %1746 = vmatprep.subr.bf16.mxu0 0
      %1747 = vmatpush1.bf16.msra.mxu0 0
      %1748 = vmatprep.subr.bf16.mxu0 0
      %1749 = vmatpush1.bf16.msra.mxu0 0
      %1750 = vmatprep.subr.bf16.mxu0 0
      %1751 = vmatpush1.bf16.msra.mxu0 0
      %1752 = vmatprep.subr.bf16.mxu0 0
      %1753 = vmatpush1.bf16.msra.mxu0 0
      %1754 = vmatprep.subr.bf16.mxu0 0
      %1755 = vmatpush1.bf16.msra.mxu0 0
      %1756 = vmatprep.subr.bf16.mxu0 0
      %1757 = vmatpush1.bf16.msra.mxu0 %v1725
      %1758 = vmatprep.subr.bf16.mxu0 0
      %1759 = vmatpush2.bf16.msra.mxu0 0
      %1760 = vmatprep.subr.bf16.mxu0 0
      %1761 = vmatpush2.bf16.msra.mxu0 0
      %1762 = vmatprep.subr.bf16.mxu0 0
      %1763 = vmatpush2.bf16.msra.mxu0 0
      %1764 = vmatprep.subr.bf16.mxu0 0
      %1765 = vmatpush2.bf16.msra.mxu0 0
      %1766 = vmatprep.subr.bf16.mxu0 0
      %1767 = vmatpush2.bf16.msra.mxu0 0
      %1768 = vmatprep.subr.bf16.mxu0 0
      %1769 = vmatpush2.bf16.msra.mxu0 0
      %1770 = vmatprep.subr.bf16.mxu0 0
      %1771 = vmatpush2.bf16.msra.mxu0 0
      %1772 = vmatprep.subr.bf16.mxu0 0
      %1773 = vmatpush2.bf16.msra.mxu0 0
      %1774 = vmatprep.mubr.bf16.mxu0 0
      %1775 = vmatmul.mubr.bf16.gmra.mxu0 %v1728
      %v1776 = vpop.f32.mrf.mxu0
      %v1777 = vadd.f32 0.0, %v1776
      %v1778 = vpop.f32.mrf.mxu0
      %v1779 = vpop.f32.mrf.mxu0
      %v1780 = vadd.f32 0.0, %v1779
      %v1781 = vpop.f32.mrf.mxu0
      %1782 = vmatprep.mubr.bf16.mxu0 0
      %1783 = vmatmul.mubr.bf16.gmra.mxu0 %v1731
      %v1784 = vpop.f32.mrf.mxu0
      %v1785 = vadd.f32 0.0, %v1784
      %v1786 = vpop.f32.mrf.mxu0
      %v1787 = vpop.f32.mrf.mxu0
      %v1788 = vadd.f32 0.0, %v1787
      %v1789 = vpop.f32.mrf.mxu0
      %1790 = vmatprep.mubr.bf16.mxu0 0
      %1791 = vmatmul.mubr.bf16.gmra.mxu0 %v1734
      %v1792 = vpop.f32.mrf.mxu0
      %v1793 = vadd.f32 0.0, %v1792
      %v1794 = vpop.f32.mrf.mxu0
      %v1795 = vpop.f32.mrf.mxu0
      %v1796 = vadd.f32 0.0, %v1795
      %v1797 = vpop.f32.mrf.mxu0
      %1798 = vmatprep.mubr.bf16.mxu0 0
      %1799 = vmatmul.mubr.bf16.gmra.mxu0 %v1737
      %v1800 = vpop.f32.mrf.mxu0
      %v1801 = vadd.f32 0.0, %v1800
      %v1802 = vpop.f32.mrf.mxu0
      %v1803 = vpop.f32.mrf.mxu0
      %v1804 = vadd.f32 0.0, %v1803
      %v1805 = vpop.f32.mrf.mxu0
      %1806 = vmatprep.mubr.bf16.mxu0 0
      %1807 = vmatmul.mubr.bf16.gmra.mxu0 %v1740
      %v1808 = vpop.f32.mrf.mxu0
      %v1809 = vadd.f32 0.0, %v1808
      %v1810 = vpop.f32.mrf.mxu0
      %v1811 = vpop.f32.mrf.mxu0
      %v1812 = vadd.f32 0.0, %v1811
      %v1813 = vpop.f32.mrf.mxu0
      %1814 = vdwg.mxu0
      %v1815 = vld [vmem:[#allocation3] sm:$0xff]
      %v1816 = vld [vmem:[#allocation3 + $0x8] sm:$0xff]
      %v1817 = vld [vmem:[#allocation3 + $0x10] sm:$0xff]
      %v1818 = vld [vmem:[#allocation3 + $0x18] sm:$0xff]
      %v1819 = vld [vmem:[#allocation3 + $0x20] sm:$0xff]
      %v1820 = vld [vmem:[#allocation3 + $0x28] sm:$0xff]
      %v1821 = vld [vmem:[#allocation3 + $0x30] sm:$0xff]
      %v1822 = vld [vmem:[#allocation3 + $0x38] sm:$0xff]
      %v1823 = vld [vmem:[#allocation3 + $0x40] sm:$0xff]
      %v1824 = vld [vmem:[#allocation3 + $0x48] sm:$0x3f]
      %v1825 = vadd.f32 %v1815, %v1777
      %v1826 = vadd.f32 %v1816, %v1780
      %v1827 = vadd.f32 %v1817, %v1785
      %v1828 = vadd.f32 %v1818, %v1788
      %v1829 = vadd.f32 %v1819, %v1793
      %v1830 = vadd.f32 %v1820, %v1796
      %v1831 = vadd.f32 %v1821, %v1801
      %v1832 = vadd.f32 %v1822, %v1804
      %v1833 = vadd.f32 %v1823, %v1809
      %v1834 = vadd.f32 %v1824, %v1812
      %1835 = vst.msk [vmem:[#allocation3] sm:$0xff] %vm497, %v1825
      %1836 = vst.msk [vmem:[#allocation3 + $0x8] sm:$0xff] %vm497, %v1826
      %1837 = vst.msk [vmem:[#allocation3 + $0x10] sm:$0xff] %vm497, %v1827
      %1838 = vst.msk [vmem:[#allocation3 + $0x18] sm:$0xff] %vm497, %v1828
      %1839 = vst.msk [vmem:[#allocation3 + $0x20] sm:$0xff] %vm497, %v1829
      %1840 = vst.msk [vmem:[#allocation3 + $0x28] sm:$0xff] %vm497, %v1830
      %1841 = vst.msk [vmem:[#allocation3 + $0x30] sm:$0xff] %vm497, %v1831
      %1842 = vst.msk [vmem:[#allocation3 + $0x38] sm:$0xff] %vm497, %v1832
      %1843 = vst.msk [vmem:[#allocation3 + $0x40] sm:$0xff] %vm497, %v1833
      %1844 = vst.msk [vmem:[#allocation3 + $0x48] sm:$0x3f] %vm507, %v1834
      %v1845 = vld [vmem:[#allocation2 + $0x8] sm:$0x8]
      %v1846 = vld [vmem:[#allocation2 + $0xc] sm:$0xf]
      %v1847 = vld [vmem:[#allocation2 + $0x10] sm:$0xf]
      %v1848 = vld [vmem:[#allocation2 + $0x14] sm:$0xf]
      %v1849 = vld [vmem:[#allocation2 + $0x18] sm:$0xf]
      %v1850 = vld [vmem:[#allocation2 + $0x1c] sm:$0xf]
      %v1851 = vld [vmem:[#allocation2 + $0x20] sm:$0xf]
      %v1852 = vld [vmem:[#allocation2 + $0x24] sm:$0xf]
      %v1853 = vld [vmem:[#allocation2 + $0x28] sm:$0xf]
      %v1854 = vld [vmem:[#allocation2 + $0x2c] sm:$0xf]
      %v1855 = vld [vmem:[#allocation2 + $0x30] sm:$0x3]
      %s1856 = scalar_lea.vmem %s320, 64
      %v1857 = vld [vmem:[%s1856] sm:$0xf]
      %v1858 = vld [vmem:[%s1856 + $0x4] sm:$0xf]
      %v1870 = vunpack.c.l.b16 %v1845
      %v1871 = vunpack.c.l.b16 %v1846
      %v1872 = vunpack.c.l.b16 %v1847
      %v1873 = vunpack.c.l.b16 %v1848
      %v1874 = vunpack.c.l.b16 %v1849
      %v1875 = vunpack.c.l.b16 %v1850
      %v1876 = vunpack.c.l.b16 %v1851
      %v1877 = vunpack.c.l.b16 %v1852
      %v1878 = vunpack.c.l.b16 %v1853
      %v1879 = vunpack.c.l.b16 %v1854
      %v1880 = vunpack.c.l.b16 %v1855
      %v1881 = vpack.c.b16 %v1871, %v1870
      %v1882 = vpack.c.b16 %v1873, %v1872
      %v1883 = vpack.c.b16 %v1875, %v1874
      %v1884 = vpack.c.b16 %v1877, %v1876
      %v1885 = vpack.c.b16 %v1879, %v1878
      %v1886 = vpack.c.b16 %v1880, %v1880
      %vm1887 = vcmask 1044480
      %v1888 = vrot.slane %v1881, 3
      %v1889 = vrot.slane %v1882, 3
      %v1890 = vsel %vm1887, %v1888, %v1889
      %v1891 = vrot.slane %v1883, 3
      %v1892 = vsel %vm1887, %v1889, %v1891
      %v1893 = vrot.slane %v1884, 3
      %v1894 = vsel %vm1887, %v1891, %v1893
      %v1895 = vrot.slane %v1885, 3
      %v1896 = vsel %vm1887, %v1893, %v1895
      %v1897 = vrot.slane %v1886, 3
      %v1898 = vsel %vm1887, %v1895, %v1897
      %v1901 = vunpack.c.l.b16 %v1857
      %v1902 = vunpack.c.l.b16 %v1858
      %v1903 = vpack.c.b16 %v1902, %v1901
      %v1906 = vsel %vm408, %v1890, 0
      %v1909 = vsel %vm408, %v1892, 0
      %v1912 = vsel %vm408, %v1894, 0
      %v1915 = vsel %vm408, %v1896, 0
      %v1918 = vsel %vm408, %v1898, 0
      %1920 = vmatprep.subr.bf16.mxu0 0
      %1921 = vmatpush1.bf16.msra.mxu0 0
      %1922 = vmatprep.subr.bf16.mxu0 0
      %1923 = vmatpush1.bf16.msra.mxu0 0
      %1924 = vmatprep.subr.bf16.mxu0 0
      %1925 = vmatpush1.bf16.msra.mxu0 0
      %1926 = vmatprep.subr.bf16.mxu0 0
      %1927 = vmatpush1.bf16.msra.mxu0 0
      %1928 = vmatprep.subr.bf16.mxu0 0
      %1929 = vmatpush1.bf16.msra.mxu0 0
      %1930 = vmatprep.subr.bf16.mxu0 0
      %1931 = vmatpush1.bf16.msra.mxu0 0
      %1932 = vmatprep.subr.bf16.mxu0 0
      %1933 = vmatpush1.bf16.msra.mxu0 0
      %1934 = vmatprep.subr.bf16.mxu0 0
      %1935 = vmatpush1.bf16.msra.mxu0 %v1903
      %1936 = vmatprep.subr.bf16.mxu0 0
      %1937 = vmatpush2.bf16.msra.mxu0 0
      %1938 = vmatprep.subr.bf16.mxu0 0
      %1939 = vmatpush2.bf16.msra.mxu0 0
      %1940 = vmatprep.subr.bf16.mxu0 0
      %1941 = vmatpush2.bf16.msra.mxu0 0
      %1942 = vmatprep.subr.bf16.mxu0 0
      %1943 = vmatpush2.bf16.msra.mxu0 0
      %1944 = vmatprep.subr.bf16.mxu0 0
      %1945 = vmatpush2.bf16.msra.mxu0 0
      %1946 = vmatprep.subr.bf16.mxu0 0
      %1947 = vmatpush2.bf16.msra.mxu0 0
      %1948 = vmatprep.subr.bf16.mxu0 0
      %1949 = vmatpush2.bf16.msra.mxu0 0
      %1950 = vmatprep.subr.bf16.mxu0 0
      %1951 = vmatpush2.bf16.msra.mxu0 0
      %1952 = vmatprep.mubr.bf16.mxu0 0
      %1953 = vmatmul.mubr.bf16.gmra.mxu0 %v1906
      %v1954 = vpop.f32.mrf.mxu0
      %v1955 = vadd.f32 0.0, %v1954
      %v1956 = vpop.f32.mrf.mxu0
      %v1957 = vpop.f32.mrf.mxu0
      %v1958 = vadd.f32 0.0, %v1957
      %v1959 = vpop.f32.mrf.mxu0
      %1960 = vmatprep.mubr.bf16.mxu0 0
      %1961 = vmatmul.mubr.bf16.gmra.mxu0 %v1909
      %v1962 = vpop.f32.mrf.mxu0
      %v1963 = vadd.f32 0.0, %v1962
      %v1964 = vpop.f32.mrf.mxu0
      %v1965 = vpop.f32.mrf.mxu0
      %v1966 = vadd.f32 0.0, %v1965
      %v1967 = vpop.f32.mrf.mxu0
      %1968 = vmatprep.mubr.bf16.mxu0 0
      %1969 = vmatmul.mubr.bf16.gmra.mxu0 %v1912
      %v1970 = vpop.f32.mrf.mxu0
      %v1971 = vadd.f32 0.0, %v1970
      %v1972 = vpop.f32.mrf.mxu0
      %v1973 = vpop.f32.mrf.mxu0
      %v1974 = vadd.f32 0.0, %v1973
      %v1975 = vpop.f32.mrf.mxu0
      %1976 = vmatprep.mubr.bf16.mxu0 0
      %1977 = vmatmul.mubr.bf16.gmra.mxu0 %v1915
      %v1978 = vpop.f32.mrf.mxu0
      %v1979 = vadd.f32 0.0, %v1978
      %v1980 = vpop.f32.mrf.mxu0
      %v1981 = vpop.f32.mrf.mxu0
      %v1982 = vadd.f32 0.0, %v1981
      %v1983 = vpop.f32.mrf.mxu0
      %1984 = vmatprep.mubr.bf16.mxu0 0
      %1985 = vmatmul.mubr.bf16.gmra.mxu0 %v1918
      %v1986 = vpop.f32.mrf.mxu0
      %v1987 = vadd.f32 0.0, %v1986
      %v1988 = vpop.f32.mrf.mxu0
      %v1989 = vpop.f32.mrf.mxu0
      %v1990 = vadd.f32 0.0, %v1989
      %v1991 = vpop.f32.mrf.mxu0
      %1992 = vdwg.mxu0
      %v1993 = vld [vmem:[#allocation3] sm:$0xff]
      %v1994 = vld [vmem:[#allocation3 + $0x8] sm:$0xff]
      %v1995 = vld [vmem:[#allocation3 + $0x10] sm:$0xff]
      %v1996 = vld [vmem:[#allocation3 + $0x18] sm:$0xff]
      %v1997 = vld [vmem:[#allocation3 + $0x20] sm:$0xff]
      %v1998 = vld [vmem:[#allocation3 + $0x28] sm:$0xff]
      %v1999 = vld [vmem:[#allocation3 + $0x30] sm:$0xff]
      %v2000 = vld [vmem:[#allocation3 + $0x38] sm:$0xff]
      %v2001 = vld [vmem:[#allocation3 + $0x40] sm:$0xff]
      %v2002 = vld [vmem:[#allocation3 + $0x48] sm:$0x3f]
      %v2003 = vadd.f32 %v1993, %v1955
      %v2004 = vadd.f32 %v1994, %v1958
      %v2005 = vadd.f32 %v1995, %v1963
      %v2006 = vadd.f32 %v1996, %v1966
      %v2007 = vadd.f32 %v1997, %v1971
      %v2008 = vadd.f32 %v1998, %v1974
      %v2009 = vadd.f32 %v1999, %v1979
      %v2010 = vadd.f32 %v2000, %v1982
      %v2011 = vadd.f32 %v2001, %v1987
      %v2012 = vadd.f32 %v2002, %v1990
      %2013 = vst.msk [vmem:[#allocation3] sm:$0xff] %vm497, %v2003
      %2014 = vst.msk [vmem:[#allocation3 + $0x8] sm:$0xff] %vm497, %v2004
      %2015 = vst.msk [vmem:[#allocation3 + $0x10] sm:$0xff] %vm497, %v2005
      %2016 = vst.msk [vmem:[#allocation3 + $0x18] sm:$0xff] %vm497, %v2006
      %2017 = vst.msk [vmem:[#allocation3 + $0x20] sm:$0xff] %vm497, %v2007
      %2018 = vst.msk [vmem:[#allocation3 + $0x28] sm:$0xff] %vm497, %v2008
      %2019 = vst.msk [vmem:[#allocation3 + $0x30] sm:$0xff] %vm497, %v2009
      %2020 = vst.msk [vmem:[#allocation3 + $0x38] sm:$0xff] %vm497, %v2010
      %2021 = vst.msk [vmem:[#allocation3 + $0x40] sm:$0xff] %vm497, %v2011
      %2022 = vst.msk [vmem:[#allocation3 + $0x48] sm:$0x3f] %vm507, %v2012
      %v2023 = vld [vmem:[#allocation3] sm:$0xff]
      %v2024 = vld [vmem:[#allocation3 + $0x8] sm:$0xff]
      %v2025 = vld [vmem:[#allocation3 + $0x10] sm:$0xff]
      %v2026 = vld [vmem:[#allocation3 + $0x18] sm:$0xff]
      %v2027 = vld [vmem:[#allocation3 + $0x20] sm:$0xff]
      %v2028 = vld [vmem:[#allocation3 + $0x28] sm:$0xff]
      %v2029 = vld [vmem:[#allocation3 + $0x30] sm:$0xff]
      %v2030 = vld [vmem:[#allocation3 + $0x38] sm:$0xff]
      %v2031 = vld [vmem:[#allocation3 + $0x40] sm:$0xff]
      %v2032 = vld [vmem:[#allocation3 + $0x48] sm:$0x3f]
      %v2033 = vld [vmem:[%s323] sm:$0x1]
      %v2035 = vlaneseq
      %v2036 = vshrl.u32 %v2035, 7
      %v2037 = vsub.s32 0, %v2036
      %v2038 = vrot.slane %v2033, %v2037
      %v2040 = vadd.f32 %v2023, %v2038
      %v2041 = vadd.f32 %v2024, %v2038
      %v2042 = vadd.f32 %v2025, %v2038
      %v2043 = vadd.f32 %v2026, %v2038
      %v2044 = vadd.f32 %v2027, %v2038
      %v2045 = vadd.f32 %v2028, %v2038
      %v2046 = vadd.f32 %v2029, %v2038
      %v2047 = vadd.f32 %v2030, %v2038
      %v2048 = vadd.f32 %v2031, %v2038
      %v2049 = vadd.f32 %v2032, %v2038
      %v2050 = vmax.f32 %v2040, 0.0
      %v2051 = vmax.f32 %v2041, 0.0
      %v2052 = vmax.f32 %v2042, 0.0
      %v2053 = vmax.f32 %v2043, 0.0
      %v2054 = vmax.f32 %v2044, 0.0
      %v2055 = vmax.f32 %v2045, 0.0
      %v2056 = vmax.f32 %v2046, 0.0
      %v2057 = vmax.f32 %v2047, 0.0
      %v2058 = vmax.f32 %v2048, 0.0
      %v2059 = vmax.f32 %v2049, 0.0
      %v2060 = vpack.c.bf16 %v2051, %v2050
      %v2061 = vpack.c.bf16 %v2053, %v2052
      %v2062 = vpack.c.bf16 %v2055, %v2054
      %v2063 = vpack.c.bf16 %v2057, %v2056
      %v2064 = vpack.c.bf16 %v2059, %v2058
      %v2070 = vunpack.c.l.b16 %v2060
      %v2071 = vunpack.c.h.b16 %v2060
      %v2072 = vunpack.c.l.b16 %v2061
      %v2073 = vunpack.c.h.b16 %v2061
      %v2074 = vunpack.c.l.b16 %v2062
      %v2075 = vunpack.c.h.b16 %v2062
      %v2076 = vunpack.c.l.b16 %v2063
      %v2077 = vunpack.c.h.b16 %v2063
      %v2078 = vunpack.c.l.b16 %v2064
      %v2079 = vunpack.c.h.b16 %v2064
      %v2080 = vpack.c.b16 %v2070, %v2070
      %v2081 = vpack.c.b16 %v2071, %v2071
      %v2082 = vpack.c.b16 %v2072, %v2072
      %v2083 = vpack.c.b16 %v2073, %v2073
      %v2084 = vpack.c.b16 %v2074, %v2074
      %v2085 = vpack.c.b16 %v2075, %v2075
      %v2086 = vpack.c.b16 %v2076, %v2076
      %v2087 = vpack.c.b16 %v2077, %v2077
      %v2088 = vpack.c.b16 %v2078, %v2078
      %v2089 = vpack.c.b16 %v2079, %v2079
      %vm2100 = vcmask 257024
      %2101 = vst.msk [vmem:[%s335] sm:$0xf] %vm2100, %v2080
      %2102 = vst.msk [vmem:[%s335 + $0x4] sm:$0xf] %vm2100, %v2081
      %2103 = vst.msk [vmem:[%s335 + $0x8] sm:$0xf] %vm2100, %v2082
      %2104 = vst.msk [vmem:[%s335 + $0xc] sm:$0xf] %vm2100, %v2083
      %2105 = vst.msk [vmem:[%s335 + $0x10] sm:$0xf] %vm2100, %v2084
      %2106 = vst.msk [vmem:[%s335 + $0x14] sm:$0xf] %vm2100, %v2085
      %2107 = vst.msk [vmem:[%s335 + $0x18] sm:$0xf] %vm2100, %v2086
      %2108 = vst.msk [vmem:[%s335 + $0x1c] sm:$0xf] %vm2100, %v2087
      %2109 = vst.msk [vmem:[%s335 + $0x20] sm:$0xf] %vm2100, %v2088
      %vm2110 = vcmask 256000
      %2111 = vst.msk [vmem:[%s335 + $0x24] sm:$0x7] %vm2110, %v2089
      %vm2112 = vcmask 257027
      %2113 = vst.msk [vmem:[%s335 + $0x24] sm:$0x8] %vm2112, 0
      %p2114 = scmp.lt.s32.totalorder %s21, 1
      %s2115 = scalar_select %p2114, %s21, 1
      %p2116 = scmp.lt.s32.totalorder %s22, 0
      %s2117 = scalar_select %p2116, %s22, 0
      %p2118 = scmp.lt.s32.totalorder %s20, 0
      %s2119 = scalar_select %p2118, %s20, 0
      %s2120 = smul.addr %s2117, 10
      %s2121 = sadd.s32 %s2119, %s2120
      %s2122 = smul.addr %s2115, 10
      %s2123 = sadd.s32 %s2121, %s2122
      %s2124 = smul.addr %s2123, 4
      %s2125 = scalar_lea.vmem %s4, %s2124
      // Predicated region
      $region37: #{tpu_custom_call.1} parent=35 // pred_check
        %p2126 = pneg %p164
      $region38: #{tpu_custom_call.1} parent=35 // pred_check_branch
        %2128 = sbr.rel (%p2126) target = $region40
      $region39: #{tpu_custom_call.1} parent=35 // pred_region
        _
      $region40: #{tpu_custom_call.1} parent=35 // pred_fallthru
        _
    $region36: #{tpu_custom_call.1} parent=5 // pred_fallthru
      _
    %p2129 = scmp.le.s32.totalorder 2, %s10
    // Predicated region
    $region41: #{tpu_custom_call.1} parent=5 // pred_check
      %p2130 = pneg %p2129
    $region42: #{tpu_custom_call.1} parent=5 // pred_check_branch
      %2132 = sbr.rel (%p2130) target = $region44
    $region43: #{tpu_custom_call.1} parent=5 // pred_region
      %s2133 = ssub.s32 %s10, 2
      // Predicated region
      $region45: #{tpu_custom_call.1} parent=43 // pred_check
        %p2134 = pneg %p170
      $region46: #{tpu_custom_call.1} parent=43 // pred_check_branch
        %2136 = sbr.rel (%p2134) target = $region48
      $region47: #{tpu_custom_call.1} parent=43 // pred_region
        %p2137 = scmp.lt.s32.totalorder %s24, 1
        %s2138 = scalar_select %p2137, %s24, 1
        %p2139 = scmp.lt.s32.totalorder %s25, 0
        %s2140 = scalar_select %p2139, %s25, 0
        %p2141 = scmp.lt.s32.totalorder %s23, 0
        %s2142 = scalar_select %p2141, %s23, 0
        %s2143 = smul.addr %s2140, 10
        %s2144 = sadd.s32 %s2142, %s2143
        %s2145 = smul.addr %s2138, 10
        %s2146 = sadd.s32 %s2144, %s2145
        %s2147 = smul.addr %s2146, 4
        %s2148 = scalar_lea.vmem %s4, %s2147
      $region48: #{tpu_custom_call.1} parent=43 // pred_fallthru
        _
    $region44: #{tpu_custom_call.1} parent=5 // pred_fallthru
      _
  $region6: #{tpu_custom_call.1} parent=0 // loop_footer
    %s14 = sadd.s32 1, %s10
  $region7: #{tpu_custom_call.1} parent=0 // loop_footer_branch
    %9 = sbr.rel target = $region3
  $region8: #{tpu_custom_call.1} parent=0 // loop_exit
    _

</llo_original>
